<compile_context>
chip_gen: v7x
topology: tpu7x:2x2x1
jax: 0.10.0
libtpu: 0.0.40
codegen_flags: <defaults>
</compile_context>

<pallas_src>
import functools

import jax
import jax.numpy as jnp
from jax.experimental import pallas as pl
from jax.experimental.pallas import tpu as pltpu


def _mha_global_ln_kernel(x_ref, wqkv_ref, bqkv_ref, wo_ref, bo_ref, y_ref,
                          qkv_sc, ctx_sc, *, B, nb, S, D, nh, d_k, d_kp,
                          bf16_exp):
    """Fused MHA + output projection + residual + global layer norm.

    x_ref   : (nb, D, S) f32   -- NCHW-flattened input tile (no wrapper transpose)
    wqkv_ref: (D, 3*nh*d_kp) bf16, head-blocked & lane-padded fused QKV weight
    bqkv_ref: (1, 3*nh*d_kp) f32
    wo_ref  : (nh*d_kp, D) bf16 (rows padded to match the ctx concat layout)
    bo_ref  : (1, D) f32
    y_ref   : (B, D, S) f32    -- VMEM-resident across the whole grid
    qkv_sc  : (nb*S, 3*nh*d_kp) f32 VMEM scratch (staged QKV)
    ctx_sc  : (nb*S, nh*d_kp)   f32 VMEM scratch (concatenated head contexts)
    """
    i = pl.program_id(0)
    inv_scale = 2.0 / float(d_k)          # torch: / ((d_model/num_heads)**1 / 2)

    # ---- fused QKV projection; input stays in (D, S) layout (transpose folded) ----
    for bi in range(nb):                                       # static unroll
        x_ds = x_ref[bi].astype(jnp.bfloat16)                  # (D, S)
        qkv_b = jax.lax.dot_general(                           # x^T @ Wqkv (lhs-T on MXU)
            x_ds, wqkv_ref[...],
            (((0,), (0,)), ((), ())),
            preferred_element_type=jnp.float32) + bqkv_ref[...]     # (S, 3*nh*d_kp) f32
        qkv_sc[bi * S:(bi + 1) * S, :] = qkv_b

    # ---- per-batch / per-head attention; contexts concatenated into ctx_sc ----
    for bi in range(nb):
        r0 = bi * S
        for h in range(nh):
            q = qkv_sc[r0:r0 + S, h * d_kp:(h + 1) * d_kp].astype(jnp.bfloat16)
            k = qkv_sc[r0:r0 + S,
                       (nh + h) * d_kp:(nh + h + 1) * d_kp].astype(jnp.bfloat16)
            v = qkv_sc[r0:r0 + S,
                       (2 * nh + h) * d_kp:(2 * nh + h + 1) * d_kp].astype(jnp.bfloat16)

            # scores = q @ k^T (rhs-transposed MXU op); padded columns are zero.
            scores = jax.lax.dot_general(
                q, k, (((1,), (1,)), ((), ())),
                preferred_element_type=jnp.float32) * inv_scale     # (S, S) f32

            # Hand-rolled softmax; reciprocal goes to the EUP slot.
            m = jnp.max(scores, axis=-1, keepdims=True)
            z = scores - m
            if bf16_exp:                     # enable on v6e/v7x at scale; NOT on v5e
                z = z.astype(jnp.bfloat16)
            e = jnp.exp(z).astype(jnp.float32)
            denom = jnp.sum(e, axis=-1, keepdims=True)
            probs = e * pl.reciprocal(denom, approx=True)

            ctx_sc[r0:r0 + S, h * d_kp:(h + 1) * d_kp] = jnp.dot(
                probs.astype(jnp.bfloat16), v,
                preferred_element_type=jnp.float32)                 # (S, d_kp)

    # ---- single K = nh*d_kp output projection over all nb*S rows, plus bias ----
    o = jnp.dot(ctx_sc[...].astype(jnp.bfloat16), wo_ref[...],
                preferred_element_type=jnp.float32) + bo_ref[...]   # (nb*S, D) f32

    # ---- residual in (D, S) layout; write pre-norm r into the resident output ----
    for bi in range(nb):
        o_t = jnp.transpose(o[bi * S:(bi + 1) * S, :])              # (D, S) XLU transpose
        y_ref[i * nb + bi] = o_t + x_ref[bi]

    # ---- last grid step: exact two-pass global layer norm on VMEM-resident r ----
    @pl.when(i == pl.num_programs(0) - 1)
    def _():
        n = float(B * D * S)
        r_all = y_ref[...]                                          # (B, D, S)
        mean = jnp.sum(r_all) / n
        centered = r_all - mean
        var = jnp.sum(centered * centered) / n                      # exact two-pass var
        y_ref[...] = centered * jax.lax.rsqrt(var + 1e-5)


def multi_head_attention_forward(data_nchw, params, *, d_k=64, bf16_exp=False):
    """data_nchw: (B, C=d_model, H, W) float32 -> (B, C, H, W) float32."""
    wq, bq, wk, bk, wv, bv, wo, bo = params
    B, C, H, W = data_nchw.shape
    D = C
    S = H * W
    assert D % d_k == 0, "d_model must be a multiple of d_k"
    nh = D // d_k
    d_kp = ((d_k + 127) // 128) * 128        # lane-aligned per-head width

    # NCHW -> (B, D, S): a FREE reshape (no transpose); the kernel folds the
    # (B, S, D) permutation into its matmuls / output layout.
    x_cds = data_nchw.reshape(B, D, S).astype(jnp.float32)

    # ---- head-blocked, lane-padded fused weights (one-time weight prep) ----
    def _pad_cols(w):          # (D, D) -> (D, nh*d_kp)
        w3 = jnp.pad(w.reshape(D, nh, d_k), ((0, 0), (0, 0), (0, d_kp - d_k)))
        return w3.reshape(D, nh * d_kp)

    def _pad_bias(b):          # (1, D) -> (1, nh*d_kp)
        b3 = jnp.pad(b.reshape(1, nh, d_k), ((0, 0), (0, 0), (0, d_kp - d_k)))
        return b3.reshape(1, nh * d_kp)

    wqkv_p = jnp.concatenate([_pad_cols(wq), _pad_cols(wk), _pad_cols(wv)],
                             axis=1).astype(jnp.bfloat16)           # (D, 3*nh*d_kp)
    bqkv_p = jnp.concatenate([_pad_bias(bq), _pad_bias(bk), _pad_bias(bv)],
                             axis=1).astype(jnp.float32)            # (1, 3*nh*d_kp)
    wo_p = jnp.pad(wo.reshape(nh, d_k, D),
                   ((0, 0), (0, d_kp - d_k), (0, 0))
                   ).reshape(nh * d_kp, D).astype(jnp.bfloat16)      # (nh*d_kp, D)
    bo_f = bo.astype(jnp.float32)                                    # (1, D)

    # Coalesce batches per grid step so the output-projection matmul sees nb*S rows.
    nb = 1
    for cand in range(min(B, max(1, 512 // max(S, 1))), 0, -1):
        if B % cand == 0:
            nb = cand
            break
    grid = (B // nb,)

    kernel = functools.partial(_mha_global_ln_kernel, B=B, nb=nb, S=S, D=D,
                               nh=nh, d_k=d_k, d_kp=d_kp, bf16_exp=bf16_exp)

    y_cds = pl.pallas_call(
        kernel,
        grid=grid,
        in_specs=[
            pl.BlockSpec((nb, D, S), lambda i: (i, 0, 0)),           # x batch block
            pl.BlockSpec((D, 3 * nh * d_kp), lambda i: (0, 0)),      # fused QKV weight
            pl.BlockSpec((1, 3 * nh * d_kp), lambda i: (0, 0)),      # fused QKV bias
            pl.BlockSpec((nh * d_kp, D), lambda i: (0, 0)),          # output proj weight
            pl.BlockSpec((1, D), lambda i: (0, 0)),                  # output proj bias
        ],
        # Constant index map => output block is VMEM-resident across the grid; it
        # holds the pre-norm residual until the final in-place layer norm.
        out_specs=pl.BlockSpec((B, D, S), lambda i: (0, 0, 0)),
        out_shape=jax.ShapeDtypeStruct((B, D, S), jnp.float32),
        scratch_shapes=[
            pltpu.VMEM((nb * S, 3 * nh * d_kp), jnp.float32),        # staged QKV
            pltpu.VMEM((nb * S, nh * d_kp), jnp.float32),            # concat contexts
        ],
        compiler_params=pltpu.CompilerParams(
            dimension_semantics=("arbitrary",),      # global-LN reduction across steps
            vmem_limit_bytes=32 * 1024 * 1024,
        ),
    )(x_cds, wqkv_p, bqkv_p, wo_p, bo_f)

    # (B, D, S) -> NCHW is a FREE reshape (layout already channel-major).
    return y_cds.reshape(B, C, H, W)


def _reference_forward(data_nchw, params, *, d_k):
    """Pure-JAX f32 mirror of the PyTorch forward, for correctness checking."""
    wq, bq, wk, bk, wv, bv, wo, bo = params
    B, C, H, W = data_nchw.shape
    S = H * W
    D = C
    num_heads = D // d_k
    x = jnp.transpose(data_nchw.reshape(B, C, S), (0, 2, 1))         # (B, S, D)

    q = (x @ wq + bq).reshape(B, S, num_heads, d_k).transpose(0, 2, 1, 3)
    k = (x @ wk + bk).reshape(B, S, num_heads, d_k).transpose(0, 2, 1, 3)
    v = (x @ wv + bv).reshape(B, S, num_heads, d_k).transpose(0, 2, 1, 3)

    scale = (float(D) / float(num_heads)) ** 1 / 2.0                 # == d_k / 2
    scores = jnp.einsum('bhsk,bhtk->bhst', q, k) / scale
    probs = jax.nn.softmax(scores, axis=-1)
    o = jnp.einsum('bhst,bhtk->bhsk', probs, v)
    o = o.transpose(0, 2, 1, 3).reshape(B, S, D)
    o = o @ wo + bo

    r = o + x                                                        # residual
    mean = jnp.mean(r)
    var = jnp.mean((r - mean) ** 2)
    y = (r - mean) / jnp.sqrt(var + 1e-5)
    return jnp.transpose(y, (0, 2, 1)).reshape(B, C, H, W)


def _init_params(key, d_model):
    ks = jax.random.split(key, 8)

    def lin(kw, kb):
        w = jax.random.normal(kw, (d_model, d_model), jnp.float32) * 0.05
        b = jax.random.normal(kb, (1, d_model), jnp.float32) * 0.05
        return w, b

    wq, bq = lin(ks[0], ks[1])
    wk, bk = lin(ks[2], ks[3])
    wv, bv = lin(ks[4], ks[5])
    wo, bo = lin(ks[6], ks[7])
    return (wq, bq, wk, bk, wv, bv, wo, bo)


if __name__ == "__main__":
    # Module config: d_model must be a multiple of d_k; use d_k=64 (the default).
    d_model = 128
    d_k = 64

    # Small NCHW input consistent with the forward: (batch=2, C=d_model, H=4, W=4).
    key = jax.random.PRNGKey(0)
    k_data, k_params = jax.random.split(key)
    data = jax.random.normal(k_data, (2, d_model, 4, 4), jnp.float32)
    params = _init_params(k_params, d_model)

    out = multi_head_attention_forward(data, params, d_k=d_k)
    out = jax.block_until_ready(out)

    ref = _reference_forward(data, params, d_k=d_k)
    assert out.shape == data.shape
    # Tolerance accounts for bf16 MXU operands + approx reciprocal in softmax
    # (f32 accumulation everywhere; observed error is O(1e-3) at these scales).
    assert jnp.allclose(out, ref, atol=2e-2, rtol=2e-2), "mismatch vs JAX reference"

    print("KERNEL_OK")
</pallas_src>

<mosaic_0001>
module attributes {stable_mosaic.version = 11 : i64} {
  func.func @_mha_global_ln_kernel(%arg0: i32, %arg1: memref<2x128x16xf32, #tpu.memory_space<vmem>>, %arg2: memref<128x768xbf16, #tpu.memory_space<vmem>>, %arg3: memref<1x768xf32, #tpu.memory_space<vmem>>, %arg4: memref<256x128xbf16, #tpu.memory_space<vmem>>, %arg5: memref<1x128xf32, #tpu.memory_space<vmem>>, %arg6: memref<2x128x16xf32, #tpu.memory_space<vmem>>, %arg7: memref<32x768xf32, #tpu.memory_space<vmem>>, %arg8: memref<32x256xf32, #tpu.memory_space<vmem>>) attributes {dimension_semantics = [#tpu.dimension_semantics<arbitrary>], iteration_bounds = array<i64: 1>, scalar_prefetch = 0 : i64, scratch_operands = 2 : i64, tpu.core_type = #tpu.core_type<tc>, window_params = [{transform_indices = @transform_0, window_bounds = array<i64: 2, 128, 16>}, {pipeline_mode = #tpu.pipeline_mode<synchronous>, transform_indices = @transform_1, window_bounds = array<i64: 128, 768>}, {pipeline_mode = #tpu.pipeline_mode<synchronous>, transform_indices = @transform_2, window_bounds = array<i64: 1, 768>}, {pipeline_mode = #tpu.pipeline_mode<synchronous>, transform_indices = @transform_3, window_bounds = array<i64: 256, 128>}, {pipeline_mode = #tpu.pipeline_mode<synchronous>, transform_indices = @transform_4, window_bounds = array<i64: 1, 128>}, {pipeline_mode = #tpu.pipeline_mode<synchronous>, transform_indices = @transform_5, window_bounds = array<i64: 2, 128, 16>}]} {
    %c0 = arith.constant 0 : index
    %c0_0 = arith.constant 0 : index
    %c0_1 = arith.constant 0 : index
    %0 = vector.load %arg1[%c0, %c0_0, %c0_1] : memref<2x128x16xf32, #tpu.memory_space<vmem>>, vector<1x128x16xf32>
    %1 = vector.shape_cast %0 : vector<1x128x16xf32> to vector<128x16xf32>
    %2 = arith.truncf %1 : vector<128x16xf32> to vector<128x16xbf16>
    %c0_2 = arith.constant 0 : index
    %c0_3 = arith.constant 0 : index
    %3 = vector.load %arg2[%c0_2, %c0_3] : memref<128x768xbf16, #tpu.memory_space<vmem>>, vector<128x768xbf16>
    %cst = arith.constant dense<0.000000e+00> : vector<16x768xf32>
    %4 = tpu.matmul %2, %3, %cst {dimension_numbers = #tpu.dot_dimension_numbers<[0], [0], [1], [1], [0, 1, 1, 1], [], []>} : vector<128x16xbf16>, vector<128x768xbf16>, vector<16x768xf32> -> vector<16x768xf32>
    %c0_4 = arith.constant 0 : index
    %c0_5 = arith.constant 0 : index
    %5 = vector.load %arg3[%c0_4, %c0_5] : memref<1x768xf32, #tpu.memory_space<vmem>>, vector<1x768xf32>
    %6 = vector.broadcast %5 : vector<1x768xf32> to vector<16x768xf32>
    %7 = arith.addf %4, %6 : vector<16x768xf32>
    %c0_6 = arith.constant 0 : index
    %c0_7 = arith.constant 0 : index
    %8 = vector.load %arg7[%c0_6, %c0_7] : memref<32x768xf32, #tpu.memory_space<vmem>>, vector<16x768xf32>
    tpu.vector_store %arg7[%c0_6, %c0_7], %7 {strides = array<i32>} : memref<32x768xf32, #tpu.memory_space<vmem>>, vector<16x768xf32>,
    %c1 = arith.constant 1 : index
    %c0_8 = arith.constant 0 : index
    %c0_9 = arith.constant 0 : index
    %9 = vector.load %arg1[%c1, %c0_8, %c0_9] : memref<2x128x16xf32, #tpu.memory_space<vmem>>, vector<1x128x16xf32>
    %10 = vector.shape_cast %9 : vector<1x128x16xf32> to vector<128x16xf32>
    %11 = arith.truncf %10 : vector<128x16xf32> to vector<128x16xbf16>
    %c0_10 = arith.constant 0 : index
    %c0_11 = arith.constant 0 : index
    %12 = vector.load %arg2[%c0_10, %c0_11] : memref<128x768xbf16, #tpu.memory_space<vmem>>, vector<128x768xbf16>
    %cst_12 = arith.constant dense<0.000000e+00> : vector<16x768xf32>
    %13 = tpu.matmul %11, %12, %cst_12 {dimension_numbers = #tpu.dot_dimension_numbers<[0], [0], [1], [1], [0, 1, 1, 1], [], []>} : vector<128x16xbf16>, vector<128x768xbf16>, vector<16x768xf32> -> vector<16x768xf32>
    %c0_13 = arith.constant 0 : index
    %c0_14 = arith.constant 0 : index
    %14 = vector.load %arg3[%c0_13, %c0_14] : memref<1x768xf32, #tpu.memory_space<vmem>>, vector<1x768xf32>
    %15 = vector.broadcast %14 : vector<1x768xf32> to vector<16x768xf32>
    %16 = arith.addf %13, %15 : vector<16x768xf32>
    %c16 = arith.constant 16 : index
    %c0_15 = arith.constant 0 : index
    %17 = vector.load %arg7[%c16, %c0_15] : memref<32x768xf32, #tpu.memory_space<vmem>>, vector<16x768xf32>
    tpu.vector_store %arg7[%c16, %c0_15], %16 {strides = array<i32>} : memref<32x768xf32, #tpu.memory_space<vmem>>, vector<16x768xf32>,
    %c0_16 = arith.constant 0 : index
    %c0_17 = arith.constant 0 : index
    %18 = vector.load %arg7[%c0_16, %c0_17] : memref<32x768xf32, #tpu.memory_space<vmem>>, vector<16x128xf32>
    %19 = arith.truncf %18 : vector<16x128xf32> to vector<16x128xbf16>
    %c0_18 = arith.constant 0 : index
    %c256 = arith.constant 256 : index
    %20 = vector.load %arg7[%c0_18, %c256] : memref<32x768xf32, #tpu.memory_space<vmem>>, vector<16x128xf32>
    %21 = arith.truncf %20 : vector<16x128xf32> to vector<16x128xbf16>
    %c0_19 = arith.constant 0 : index
    %c512 = arith.constant 512 : index
    %22 = vector.load %arg7[%c0_19, %c512] : memref<32x768xf32, #tpu.memory_space<vmem>>, vector<16x128xf32>
    %23 = arith.truncf %22 : vector<16x128xf32> to vector<16x128xbf16>
    %cst_20 = arith.constant dense<0.000000e+00> : vector<16x16xf32>
    %24 = tpu.matmul %19, %21, %cst_20 {dimension_numbers = #tpu.dot_dimension_numbers<[1], [1], [0], [0], [0, 0, 1, 0], [], []>} : vector<16x128xbf16>, vector<16x128xbf16>, vector<16x16xf32> -> vector<16x16xf32>
    %cst_21 = arith.constant 3.125000e-02 : f32
    %25 = vector.broadcast %cst_21 : f32 to vector<16x16xf32>
    %26 = arith.mulf %24, %25 : vector<16x16xf32>
    %cst_22 = arith.constant dense<0xFF800000> : vector<16xf32>
    %27 = vector.multi_reduction <maximumf>, %26, %cst_22 [1] : vector<16x16xf32> to vector<16xf32>
    %28 = vector.shape_cast %27 : vector<16xf32> to vector<16x1xf32>
    %29 = vector.broadcast %28 : vector<16x1xf32> to vector<16x16xf32>
    %30 = arith.subf %26, %29 : vector<16x16xf32>
    %31 = math.exp %30 : vector<16x16xf32>
    %cst_23 = arith.constant dense<0.000000e+00> : vector<16xf32>
    %32 = vector.multi_reduction <add>, %31, %cst_23 [1] : vector<16x16xf32> to vector<16xf32>
    %33 = vector.shape_cast %32 : vector<16xf32> to vector<16x1xf32>
    %34 = tpu.reciprocal %33 {approx = true} : vector<16x1xf32> -> vector<16x1xf32>
    %35 = vector.broadcast %34 : vector<16x1xf32> to vector<16x16xf32>
    %36 = arith.mulf %31, %35 : vector<16x16xf32>
    %37 = arith.truncf %36 : vector<16x16xf32> to vector<16x16xbf16>
    %cst_24 = arith.constant dense<0.000000e+00> : vector<16x128xf32>
    %38 = tpu.matmul %37, %23, %cst_24 {dimension_numbers = #tpu.dot_dimension_numbers<[1], [0], [0], [1], [0, 0, 1, 1], [], []>} : vector<16x16xbf16>, vector<16x128xbf16>, vector<16x128xf32> -> vector<16x128xf32>
    %c0_25 = arith.constant 0 : index
    %c0_26 = arith.constant 0 : index
    %39 = vector.load %arg8[%c0_25, %c0_26] : memref<32x256xf32, #tpu.memory_space<vmem>>, vector<16x128xf32>
    tpu.vector_store %arg8[%c0_25, %c0_26], %38 {strides = array<i32>} : memref<32x256xf32, #tpu.memory_space<vmem>>, vector<16x128xf32>,
    %c0_27 = arith.constant 0 : index
    %c128 = arith.constant 128 : index
    %40 = vector.load %arg7[%c0_27, %c128] : memref<32x768xf32, #tpu.memory_space<vmem>>, vector<16x128xf32>
    %41 = arith.truncf %40 : vector<16x128xf32> to vector<16x128xbf16>
    %c0_28 = arith.constant 0 : index
    %c384 = arith.constant 384 : index
    %42 = vector.load %arg7[%c0_28, %c384] : memref<32x768xf32, #tpu.memory_space<vmem>>, vector<16x128xf32>
    %43 = arith.truncf %42 : vector<16x128xf32> to vector<16x128xbf16>
    %c0_29 = arith.constant 0 : index
    %c640 = arith.constant 640 : index
    %44 = vector.load %arg7[%c0_29, %c640] : memref<32x768xf32, #tpu.memory_space<vmem>>, vector<16x128xf32>
    %45 = arith.truncf %44 : vector<16x128xf32> to vector<16x128xbf16>
    %cst_30 = arith.constant dense<0.000000e+00> : vector<16x16xf32>
    %46 = tpu.matmul %41, %43, %cst_30 {dimension_numbers = #tpu.dot_dimension_numbers<[1], [1], [0], [0], [0, 0, 1, 0], [], []>} : vector<16x128xbf16>, vector<16x128xbf16>, vector<16x16xf32> -> vector<16x16xf32>
    %cst_31 = arith.constant 3.125000e-02 : f32
    %47 = vector.broadcast %cst_31 : f32 to vector<16x16xf32>
    %48 = arith.mulf %46, %47 : vector<16x16xf32>
    %cst_32 = arith.constant dense<0xFF800000> : vector<16xf32>
    %49 = vector.multi_reduction <maximumf>, %48, %cst_32 [1] : vector<16x16xf32> to vector<16xf32>
    %50 = vector.shape_cast %49 : vector<16xf32> to vector<16x1xf32>
    %51 = vector.broadcast %50 : vector<16x1xf32> to vector<16x16xf32>
    %52 = arith.subf %48, %51 : vector<16x16xf32>
    %53 = math.exp %52 : vector<16x16xf32>
    %cst_33 = arith.constant dense<0.000000e+00> : vector<16xf32>
    %54 = vector.multi_reduction <add>, %53, %cst_33 [1] : vector<16x16xf32> to vector<16xf32>
    %55 = vector.shape_cast %54 : vector<16xf32> to vector<16x1xf32>
    %56 = tpu.reciprocal %55 {approx = true} : vector<16x1xf32> -> vector<16x1xf32>
    %57 = vector.broadcast %56 : vector<16x1xf32> to vector<16x16xf32>
    %58 = arith.mulf %53, %57 : vector<16x16xf32>
    %59 = arith.truncf %58 : vector<16x16xf32> to vector<16x16xbf16>
    %cst_34 = arith.constant dense<0.000000e+00> : vector<16x128xf32>
    %60 = tpu.matmul %59, %45, %cst_34 {dimension_numbers = #tpu.dot_dimension_numbers<[1], [0], [0], [1], [0, 0, 1, 1], [], []>} : vector<16x16xbf16>, vector<16x128xbf16>, vector<16x128xf32> -> vector<16x128xf32>
    %c0_35 = arith.constant 0 : index
    %c128_36 = arith.constant 128 : index
    %61 = vector.load %arg8[%c0_35, %c128_36] : memref<32x256xf32, #tpu.memory_space<vmem>>, vector<16x128xf32>
    tpu.vector_store %arg8[%c0_35, %c128_36], %60 {strides = array<i32>} : memref<32x256xf32, #tpu.memory_space<vmem>>, vector<16x128xf32>,
    %c16_37 = arith.constant 16 : index
    %c0_38 = arith.constant 0 : index
    %62 = vector.load %arg7[%c16_37, %c0_38] : memref<32x768xf32, #tpu.memory_space<vmem>>, vector<16x128xf32>
    %63 = arith.truncf %62 : vector<16x128xf32> to vector<16x128xbf16>
    %c16_39 = arith.constant 16 : index
    %c256_40 = arith.constant 256 : index
    %64 = vector.load %arg7[%c16_39, %c256_40] : memref<32x768xf32, #tpu.memory_space<vmem>>, vector<16x128xf32>
    %65 = arith.truncf %64 : vector<16x128xf32> to vector<16x128xbf16>
    %c16_41 = arith.constant 16 : index
    %c512_42 = arith.constant 512 : index
    %66 = vector.load %arg7[%c16_41, %c512_42] : memref<32x768xf32, #tpu.memory_space<vmem>>, vector<16x128xf32>
    %67 = arith.truncf %66 : vector<16x128xf32> to vector<16x128xbf16>
    %cst_43 = arith.constant dense<0.000000e+00> : vector<16x16xf32>
    %68 = tpu.matmul %63, %65, %cst_43 {dimension_numbers = #tpu.dot_dimension_numbers<[1], [1], [0], [0], [0, 0, 1, 0], [], []>} : vector<16x128xbf16>, vector<16x128xbf16>, vector<16x16xf32> -> vector<16x16xf32>
    %cst_44 = arith.constant 3.125000e-02 : f32
    %69 = vector.broadcast %cst_44 : f32 to vector<16x16xf32>
    %70 = arith.mulf %68, %69 : vector<16x16xf32>
    %cst_45 = arith.constant dense<0xFF800000> : vector<16xf32>
    %71 = vector.multi_reduction <maximumf>, %70, %cst_45 [1] : vector<16x16xf32> to vector<16xf32>
    %72 = vector.shape_cast %71 : vector<16xf32> to vector<16x1xf32>
    %73 = vector.broadcast %72 : vector<16x1xf32> to vector<16x16xf32>
    %74 = arith.subf %70, %73 : vector<16x16xf32>
    %75 = math.exp %74 : vector<16x16xf32>
    %cst_46 = arith.constant dense<0.000000e+00> : vector<16xf32>
    %76 = vector.multi_reduction <add>, %75, %cst_46 [1] : vector<16x16xf32> to vector<16xf32>
    %77 = vector.shape_cast %76 : vector<16xf32> to vector<16x1xf32>
    %78 = tpu.reciprocal %77 {approx = true} : vector<16x1xf32> -> vector<16x1xf32>
    %79 = vector.broadcast %78 : vector<16x1xf32> to vector<16x16xf32>
    %80 = arith.mulf %75, %79 : vector<16x16xf32>
    %81 = arith.truncf %80 : vector<16x16xf32> to vector<16x16xbf16>
    %cst_47 = arith.constant dense<0.000000e+00> : vector<16x128xf32>
    %82 = tpu.matmul %81, %67, %cst_47 {dimension_numbers = #tpu.dot_dimension_numbers<[1], [0], [0], [1], [0, 0, 1, 1], [], []>} : vector<16x16xbf16>, vector<16x128xbf16>, vector<16x128xf32> -> vector<16x128xf32>
    %c16_48 = arith.constant 16 : index
    %c0_49 = arith.constant 0 : index
    %83 = vector.load %arg8[%c16_48, %c0_49] : memref<32x256xf32, #tpu.memory_space<vmem>>, vector<16x128xf32>
    tpu.vector_store %arg8[%c16_48, %c0_49], %82 {strides = array<i32>} : memref<32x256xf32, #tpu.memory_space<vmem>>, vector<16x128xf32>,
    %c16_50 = arith.constant 16 : index
    %c128_51 = arith.constant 128 : index
    %84 = vector.load %arg7[%c16_50, %c128_51] : memref<32x768xf32, #tpu.memory_space<vmem>>, vector<16x128xf32>
    %85 = arith.truncf %84 : vector<16x128xf32> to vector<16x128xbf16>
    %c16_52 = arith.constant 16 : index
    %c384_53 = arith.constant 384 : index
    %86 = vector.load %arg7[%c16_52, %c384_53] : memref<32x768xf32, #tpu.memory_space<vmem>>, vector<16x128xf32>
    %87 = arith.truncf %86 : vector<16x128xf32> to vector<16x128xbf16>
    %c16_54 = arith.constant 16 : index
    %c640_55 = arith.constant 640 : index
    %88 = vector.load %arg7[%c16_54, %c640_55] : memref<32x768xf32, #tpu.memory_space<vmem>>, vector<16x128xf32>
    %89 = arith.truncf %88 : vector<16x128xf32> to vector<16x128xbf16>
    %cst_56 = arith.constant dense<0.000000e+00> : vector<16x16xf32>
    %90 = tpu.matmul %85, %87, %cst_56 {dimension_numbers = #tpu.dot_dimension_numbers<[1], [1], [0], [0], [0, 0, 1, 0], [], []>} : vector<16x128xbf16>, vector<16x128xbf16>, vector<16x16xf32> -> vector<16x16xf32>
    %cst_57 = arith.constant 3.125000e-02 : f32
    %91 = vector.broadcast %cst_57 : f32 to vector<16x16xf32>
    %92 = arith.mulf %90, %91 : vector<16x16xf32>
    %cst_58 = arith.constant dense<0xFF800000> : vector<16xf32>
    %93 = vector.multi_reduction <maximumf>, %92, %cst_58 [1] : vector<16x16xf32> to vector<16xf32>
    %94 = vector.shape_cast %93 : vector<16xf32> to vector<16x1xf32>
    %95 = vector.broadcast %94 : vector<16x1xf32> to vector<16x16xf32>
    %96 = arith.subf %92, %95 : vector<16x16xf32>
    %97 = math.exp %96 : vector<16x16xf32>
    %cst_59 = arith.constant dense<0.000000e+00> : vector<16xf32>
    %98 = vector.multi_reduction <add>, %97, %cst_59 [1] : vector<16x16xf32> to vector<16xf32>
    %99 = vector.shape_cast %98 : vector<16xf32> to vector<16x1xf32>
    %100 = tpu.reciprocal %99 {approx = true} : vector<16x1xf32> -> vector<16x1xf32>
    %101 = vector.broadcast %100 : vector<16x1xf32> to vector<16x16xf32>
    %102 = arith.mulf %97, %101 : vector<16x16xf32>
    %103 = arith.truncf %102 : vector<16x16xf32> to vector<16x16xbf16>
    %cst_60 = arith.constant dense<0.000000e+00> : vector<16x128xf32>
    %104 = tpu.matmul %103, %89, %cst_60 {dimension_numbers = #tpu.dot_dimension_numbers<[1], [0], [0], [1], [0, 0, 1, 1], [], []>} : vector<16x16xbf16>, vector<16x128xbf16>, vector<16x128xf32> -> vector<16x128xf32>
    %c16_61 = arith.constant 16 : index
    %c128_62 = arith.constant 128 : index
    %105 = vector.load %arg8[%c16_61, %c128_62] : memref<32x256xf32, #tpu.memory_space<vmem>>, vector<16x128xf32>
    tpu.vector_store %arg8[%c16_61, %c128_62], %104 {strides = array<i32>} : memref<32x256xf32, #tpu.memory_space<vmem>>, vector<16x128xf32>,
    %c0_63 = arith.constant 0 : index
    %c0_64 = arith.constant 0 : index
    %106 = vector.load %arg8[%c0_63, %c0_64] : memref<32x256xf32, #tpu.memory_space<vmem>>, vector<32x256xf32>
    %107 = arith.truncf %106 : vector<32x256xf32> to vector<32x256xbf16>
    %c0_65 = arith.constant 0 : index
    %c0_66 = arith.constant 0 : index
    %108 = vector.load %arg4[%c0_65, %c0_66] : memref<256x128xbf16, #tpu.memory_space<vmem>>, vector<256x128xbf16>
    %cst_67 = arith.constant dense<0.000000e+00> : vector<32x128xf32>
    %109 = tpu.matmul %107, %108, %cst_67 {dimension_numbers = #tpu.dot_dimension_numbers<[1], [0], [0], [1], [0, 0, 1, 1], [], []>} : vector<32x256xbf16>, vector<256x128xbf16>, vector<32x128xf32> -> vector<32x128xf32>
    %c0_68 = arith.constant 0 : index
    %c0_69 = arith.constant 0 : index
    %110 = vector.load %arg5[%c0_68, %c0_69] : memref<1x128xf32, #tpu.memory_space<vmem>>, vector<1x128xf32>
    %111 = vector.broadcast %110 : vector<1x128xf32> to vector<32x128xf32>
    %112 = arith.addf %109, %111 : vector<32x128xf32>
    %113 = vector.extract_strided_slice %112 {offsets = [0, 0], sizes = [16, 128], strides = [1, 1]} : vector<32x128xf32> to vector<16x128xf32>
    %114 = tpu.transpose %113, [1, 0] : vector<16x128xf32> -> vector<128x16xf32>
    %c0_70 = arith.constant 0 : index
    %c0_71 = arith.constant 0 : index
    %c0_72 = arith.constant 0 : index
    %115 = vector.load %arg1[%c0_70, %c0_71, %c0_72] : memref<2x128x16xf32, #tpu.memory_space<vmem>>, vector<1x128x16xf32>
    %116 = vector.shape_cast %115 : vector<1x128x16xf32> to vector<128x16xf32>
    %117 = arith.addf %114, %116 : vector<128x16xf32>
    %c2_i32 = arith.constant 2 : i32
    %118 = arith.muli %arg0, %c2_i32 : i32
    %c0_i32 = arith.constant 0 : i32
    %119 = arith.addi %118, %c0_i32 : i32
    %120 = arith.index_cast %119 : i32 to index
    %c0_73 = arith.constant 0 : index
    %c0_74 = arith.constant 0 : index
    %121 = vector.load %arg6[%120, %c0_73, %c0_74] : memref<2x128x16xf32, #tpu.memory_space<vmem>>, vector<1x128x16xf32>
    %122 = vector.shape_cast %121 : vector<1x128x16xf32> to vector<128x16xf32>
    %123 = vector.shape_cast %117 : vector<128x16xf32> to vector<1x128x16xf32>
    tpu.vector_store %arg6[%120, %c0_73, %c0_74], %123 {strides = array<i32>} : memref<2x128x16xf32, #tpu.memory_space<vmem>>, vector<1x128x16xf32>,
    %124 = vector.extract_strided_slice %112 {offsets = [16, 0], sizes = [16, 128], strides = [1, 1]} : vector<32x128xf32> to vector<16x128xf32>
    %125 = tpu.transpose %124, [1, 0] : vector<16x128xf32> -> vector<128x16xf32>
    %c1_75 = arith.constant 1 : index
    %c0_76 = arith.constant 0 : index
    %c0_77 = arith.constant 0 : index
    %126 = vector.load %arg1[%c1_75, %c0_76, %c0_77] : memref<2x128x16xf32, #tpu.memory_space<vmem>>, vector<1x128x16xf32>
    %127 = vector.shape_cast %126 : vector<1x128x16xf32> to vector<128x16xf32>
    %128 = arith.addf %125, %127 : vector<128x16xf32>
    %c2_i32_78 = arith.constant 2 : i32
    %129 = arith.muli %arg0, %c2_i32_78 : i32
    %c1_i32 = arith.constant 1 : i32
    %130 = arith.addi %129, %c1_i32 : i32
    %131 = arith.index_cast %130 : i32 to index
    %c0_79 = arith.constant 0 : index
    %c0_80 = arith.constant 0 : index
    %132 = vector.load %arg6[%131, %c0_79, %c0_80] : memref<2x128x16xf32, #tpu.memory_space<vmem>>, vector<1x128x16xf32>
    %133 = vector.shape_cast %132 : vector<1x128x16xf32> to vector<128x16xf32>
    %134 = vector.shape_cast %128 : vector<128x16xf32> to vector<1x128x16xf32>
    tpu.vector_store %arg6[%131, %c0_79, %c0_80], %134 {strides = array<i32>} : memref<2x128x16xf32, #tpu.memory_space<vmem>>, vector<1x128x16xf32>,
    %c0_i32_81 = arith.constant 0 : i32
    %135 = arith.cmpi eq, %arg0, %c0_i32_81 : i32
    %136 = arith.extui %135 : i1 to i32
    %c0_i32_82 = arith.constant 0 : i32
    %137 = arith.cmpi ne, %136, %c0_i32_82 : i32
    scf.if %137 {
      %c0_83 = arith.constant 0 : index
      %c0_84 = arith.constant 0 : index
      %c0_85 = arith.constant 0 : index
      %138 = vector.load %arg6[%c0_83, %c0_84, %c0_85] : memref<2x128x16xf32, #tpu.memory_space<vmem>>, vector<2x128x16xf32>
      %139 = vector.shape_cast %138 : vector<2x128x16xf32> to vector<1x2x128x16xf32>
      %cst_86 = arith.constant dense<0.000000e+00> : vector<1xf32>
      %140 = vector.multi_reduction <add>, %139, %cst_86 [1, 2, 3] : vector<1x2x128x16xf32> to vector<1xf32>
      %141 = vector.shape_cast %140 : vector<1xf32> to vector<1x1x1x1xf32>
      %142 = vector.extract %141[0, 0, 0, 0] : f32 from vector<1x1x1x1xf32>
      %cst_87 = arith.constant 4.096000e+03 : f32
      %143 = arith.divf %142, %cst_87 : f32
      %144 = vector.broadcast %143 : f32 to vector<2x128x16xf32>
      %145 = arith.subf %138, %144 : vector<2x128x16xf32>
      %146 = arith.mulf %145, %145 : vector<2x128x16xf32>
      %147 = vector.shape_cast %146 : vector<2x128x16xf32> to vector<1x2x128x16xf32>
      %cst_88 = arith.constant dense<0.000000e+00> : vector<1xf32>
      %148 = vector.multi_reduction <add>, %147, %cst_88 [1, 2, 3] : vector<1x2x128x16xf32> to vector<1xf32>
      %149 = vector.shape_cast %148 : vector<1xf32> to vector<1x1x1x1xf32>
      %150 = vector.extract %149[0, 0, 0, 0] : f32 from vector<1x1x1x1xf32>
      %cst_89 = arith.constant 4.096000e+03 : f32
      %151 = arith.divf %150, %cst_89 : f32
      %cst_90 = arith.constant 9.99999974E-6 : f32
      %152 = arith.addf %151, %cst_90 : f32
      %153 = math.rsqrt %152 : f32
      %154 = vector.broadcast %153 : f32 to vector<2x128x16xf32>
      %155 = arith.mulf %145, %154 : vector<2x128x16xf32>
      %c0_91 = arith.constant 0 : index
      %c0_92 = arith.constant 0 : index
      %c0_93 = arith.constant 0 : index
      %156 = vector.load %arg6[%c0_91, %c0_92, %c0_93] : memref<2x128x16xf32, #tpu.memory_space<vmem>>, vector<2x128x16xf32>
      tpu.vector_store %arg6[%c0_91, %c0_92, %c0_93], %155 {strides = array<i32>} : memref<2x128x16xf32, #tpu.memory_space<vmem>>, vector<2x128x16xf32>,
    } else {
    }
    return
  }
  func.func @transform_0(%arg0: i32) -> (i32, i32, i32) {
    %c0_i32 = arith.constant 0 : i32
    %c0_i32_0 = arith.constant 0 : i32
    %c0_i32_1 = arith.constant 0 : i32
    return %arg0, %c0_i32, %c0_i32_0 : i32, i32, i32
  }
  func.func @transform_1(%arg0: i32) -> (i32, i32) {
    %c0_i32 = arith.constant 0 : i32
    %c0_i32_0 = arith.constant 0 : i32
    %c0_i32_1 = arith.constant 0 : i32
    return %c0_i32, %c0_i32_0 : i32, i32
  }
  func.func @transform_2(%arg0: i32) -> (i32, i32) {
    %c0_i32 = arith.constant 0 : i32
    %c0_i32_0 = arith.constant 0 : i32
    %c0_i32_1 = arith.constant 0 : i32
    return %c0_i32, %c0_i32_0 : i32, i32
  }
  func.func @transform_3(%arg0: i32) -> (i32, i32) {
    %c0_i32 = arith.constant 0 : i32
    %c0_i32_0 = arith.constant 0 : i32
    %c0_i32_1 = arith.constant 0 : i32
    return %c0_i32, %c0_i32_0 : i32, i32
  }
  func.func @transform_4(%arg0: i32) -> (i32, i32) {
    %c0_i32 = arith.constant 0 : i32
    %c0_i32_0 = arith.constant 0 : i32
    %c0_i32_1 = arith.constant 0 : i32
    return %c0_i32, %c0_i32_0 : i32, i32
  }
  func.func @transform_5(%arg0: i32) -> (i32, i32, i32) {
    %c0_i32 = arith.constant 0 : i32
    %c0_i32_0 = arith.constant 0 : i32
    %c0_i32_1 = arith.constant 0 : i32
    %c0_i32_2 = arith.constant 0 : i32
    return %c0_i32, %c0_i32_0, %c0_i32_1 : i32, i32, i32
  }
}

</mosaic_0001>

<llo_original>
// kernel: tpu_custom_call.1
$region0: #{tpu_custom_call.1}
  #allocation0 [shape = 'u32[]', space=smem, size = 0x4, offset = 0x4, fixed_abs, tag = 'smem constant byte address 0x4 - core index']
  #allocation1 [shape = 'u32[144,128]{1,0:T(1,128)}', space=vmem, size = 0x12000, scoped, tag = 'internal scratch']
  #allocation2 [shape = 'f32[32,768]{1,0:T(8,128)}', space=vmem, size = 0x18000, scoped, tag = 'scratch operand']
  #allocation3 [shape = 'f32[32,256]{1,0:T(8,128)}', space=vmem, size = 0x8000, scoped, tag = 'scratch operand']
  %s0 = inlined_call_operand.vmem [shape: f32[2,128,16], index: 0, kind: input, shape index: {}]
  %s1 = inlined_call_operand.hbm [shape: bf16[128,768], index: 1, kind: input, shape index: {}]
  %s2 = inlined_call_operand.vmem [shape: f32[1,768], index: 2, kind: input, shape index: {}]
  %s3 = inlined_call_operand.vmem [shape: bf16[256,128], index: 3, kind: input, shape index: {}]
  %s4 = inlined_call_operand.vmem [shape: f32[1,128], index: 4, kind: input, shape index: {}]
  %s5 = inlined_call_operand.vmem [shape: f32[2,128,16], index: 5, kind: output, shape index: {}]
  %s6 = sld [smem:[#allocation0]]
  $region38: #{tpu_custom_call.1} parent=0
    _
  %s8 = ssub.s32 1, %s6
  %s9 = scalar_select 0, %s8, %s6
  $region1: #{tpu_custom_call.1} parent=0
    #allocation4 [shape = 'u8[196608]{0}', space=vmem, size = 0x30000, scoped, tag = 'input window, operand 1, single buffered']
    #allocation5 [shape = 's32[1]{0}', space=sflag, size = 0x4, scoped, tag = 'scoped memory for tpu_custom_call.1']
    %10 = vsyncpa [#allocation5], 0
    // Predicated region
    $region2: #{tpu_custom_call.1} parent=1 // pred_check
      _
    $region3: #{tpu_custom_call.1} parent=1 // pred_check_branch
      %12 = sbr.rel (0) target = $region5
    $region4: #{tpu_custom_call.1} parent=1 // pred_region
      _
    $region5: #{tpu_custom_call.1} parent=1 // pred_fallthru
      _
    // Predicated region
    $region6: #{tpu_custom_call.1} parent=1 // pred_check
      _
    $region7: #{tpu_custom_call.1} parent=1 // pred_check_branch
      %14 = sbr.rel (0) target = $region9
    $region8: #{tpu_custom_call.1} parent=1 // pred_region
      %s16 = ssub.s32 6144, 6144
      %17 = vsyncadd [#allocation5], %s16
      %s18 = sshll.u32 [#allocation4], 4
      %s19 = int_to_ptr.vmem [resolvable:$true] %s18
      %24 = dma.hbm_to_vmem [thread:$0]  %s1, 6144, %s19, [#allocation5], 384, 384, 24
    $region9: #{tpu_custom_call.1} parent=1 // pred_fallthru
      _
    // Predicated region
    $region10: #{tpu_custom_call.1} parent=1 // pred_check
      _
    $region11: #{tpu_custom_call.1} parent=1 // pred_check_branch
      %26 = sbr.rel (0) target = $region13
    $region12: #{tpu_custom_call.1} parent=1 // pred_region
      _
    $region13: #{tpu_custom_call.1} parent=1 // pred_fallthru
      _
    // Predicated region
    $region14: #{tpu_custom_call.1} parent=1 // pred_check
      _
    $region15: #{tpu_custom_call.1} parent=1 // pred_check_branch
      %28 = sbr.rel (0) target = $region17
    $region16: #{tpu_custom_call.1} parent=1 // pred_region
      _
    $region17: #{tpu_custom_call.1} parent=1 // pred_fallthru
      _
    // Predicated region
    $region18: #{tpu_custom_call.1} parent=1 // pred_check
      _
    $region19: #{tpu_custom_call.1} parent=1 // pred_check_branch
      %30 = sbr.rel (0) target = $region21
    $region20: #{tpu_custom_call.1} parent=1 // pred_region
      _
    $region21: #{tpu_custom_call.1} parent=1 // pred_fallthru
      _
    // Predicated region
    $region22: #{tpu_custom_call.1} parent=1 // pred_check
      _
    $region23: #{tpu_custom_call.1} parent=1 // pred_check_branch
      %32 = sbr.rel (0) target = $region25
    $region24: #{tpu_custom_call.1} parent=1 // pred_region
      %33 = dma.done [#allocation5], 6144
    $region25: #{tpu_custom_call.1} parent=1 // pred_fallthru
      _
    %v35 = vld [vmem:[%s0] sm:$0xff]
    %v36 = vld [vmem:[%s0 + $0x8] sm:$0xff]
    %v37 = vld [vmem:[%s0 + $0x10] sm:$0xff]
    %v38 = vld [vmem:[%s0 + $0x18] sm:$0xff]
    %v39 = vld [vmem:[%s0 + $0x20] sm:$0xff]
    %v40 = vld [vmem:[%s0 + $0x28] sm:$0xff]
    %v41 = vld [vmem:[%s0 + $0x30] sm:$0xff]
    %v42 = vld [vmem:[%s0 + $0x38] sm:$0xff]
    %v43 = vld [vmem:[%s0 + $0x40] sm:$0xff]
    %v44 = vld [vmem:[%s0 + $0x48] sm:$0xff]
    %v45 = vld [vmem:[%s0 + $0x50] sm:$0xff]
    %v46 = vld [vmem:[%s0 + $0x58] sm:$0xff]
    %v47 = vld [vmem:[%s0 + $0x60] sm:$0xff]
    %v48 = vld [vmem:[%s0 + $0x68] sm:$0xff]
    %v49 = vld [vmem:[%s0 + $0x70] sm:$0xff]
    %v50 = vld [vmem:[%s0 + $0x78] sm:$0xff]
    %v51 = vpack.c.bf16 %v36, %v35
    %v52 = vpack.c.bf16 %v38, %v37
    %v53 = vpack.c.bf16 %v40, %v39
    %v54 = vpack.c.bf16 %v42, %v41
    %v55 = vpack.c.bf16 %v44, %v43
    %v56 = vpack.c.bf16 %v46, %v45
    %v57 = vpack.c.bf16 %v48, %v47
    %v58 = vpack.c.bf16 %v50, %v49
    %v59 = vld [vmem:[#allocation4] sm:$0xff]
    %v60 = vld [vmem:[#allocation4 + $0x8] sm:$0xff]
    %v61 = vld [vmem:[#allocation4 + $0x10] sm:$0xff]
    %v62 = vld [vmem:[#allocation4 + $0x18] sm:$0xff]
    %v63 = vld [vmem:[#allocation4 + $0x20] sm:$0xff]
    %v64 = vld [vmem:[#allocation4 + $0x28] sm:$0xff]
    %v65 = vld [vmem:[#allocation4 + $0x30] sm:$0xff]
    %v66 = vld [vmem:[#allocation4 + $0x38] sm:$0xff]
    %v67 = vld [vmem:[#allocation4 + $0x40] sm:$0xff]
    %v68 = vld [vmem:[#allocation4 + $0x48] sm:$0xff]
    %v69 = vld [vmem:[#allocation4 + $0x50] sm:$0xff]
    %v70 = vld [vmem:[#allocation4 + $0x58] sm:$0xff]
    %v71 = vld [vmem:[#allocation4 + $0x60] sm:$0xff]
    %v72 = vld [vmem:[#allocation4 + $0x68] sm:$0xff]
    %v73 = vld [vmem:[#allocation4 + $0x70] sm:$0xff]
    %v74 = vld [vmem:[#allocation4 + $0x78] sm:$0xff]
    %v75 = vld [vmem:[#allocation4 + $0x80] sm:$0xff]
    %v76 = vld [vmem:[#allocation4 + $0x88] sm:$0xff]
    %v77 = vld [vmem:[#allocation4 + $0x90] sm:$0xff]
    %v78 = vld [vmem:[#allocation4 + $0x98] sm:$0xff]
    %v79 = vld [vmem:[#allocation4 + $0xa0] sm:$0xff]
    %v80 = vld [vmem:[#allocation4 + $0xa8] sm:$0xff]
    %v81 = vld [vmem:[#allocation4 + $0xb0] sm:$0xff]
    %v82 = vld [vmem:[#allocation4 + $0xb8] sm:$0xff]
    %v83 = vld [vmem:[#allocation4 + $0xc0] sm:$0xff]
    %v84 = vld [vmem:[#allocation4 + $0xc8] sm:$0xff]
    %v85 = vld [vmem:[#allocation4 + $0xd0] sm:$0xff]
    %v86 = vld [vmem:[#allocation4 + $0xd8] sm:$0xff]
    %v87 = vld [vmem:[#allocation4 + $0xe0] sm:$0xff]
    %v88 = vld [vmem:[#allocation4 + $0xe8] sm:$0xff]
    %v89 = vld [vmem:[#allocation4 + $0xf0] sm:$0xff]
    %v90 = vld [vmem:[#allocation4 + $0xf8] sm:$0xff]
    %v91 = vld [vmem:[#allocation4 + $0x100] sm:$0xff]
    %v92 = vld [vmem:[#allocation4 + $0x108] sm:$0xff]
    %v93 = vld [vmem:[#allocation4 + $0x110] sm:$0xff]
    %v94 = vld [vmem:[#allocation4 + $0x118] sm:$0xff]
    %v95 = vld [vmem:[#allocation4 + $0x120] sm:$0xff]
    %v96 = vld [vmem:[#allocation4 + $0x128] sm:$0xff]
    %v97 = vld [vmem:[#allocation4 + $0x130] sm:$0xff]
    %v98 = vld [vmem:[#allocation4 + $0x138] sm:$0xff]
    %v99 = vld [vmem:[#allocation4 + $0x140] sm:$0xff]
    %v100 = vld [vmem:[#allocation4 + $0x148] sm:$0xff]
    %v101 = vld [vmem:[#allocation4 + $0x150] sm:$0xff]
    %v102 = vld [vmem:[#allocation4 + $0x158] sm:$0xff]
    %v103 = vld [vmem:[#allocation4 + $0x160] sm:$0xff]
    %v104 = vld [vmem:[#allocation4 + $0x168] sm:$0xff]
    %v105 = vld [vmem:[#allocation4 + $0x170] sm:$0xff]
    %v106 = vld [vmem:[#allocation4 + $0x178] sm:$0xff]
    %v107 = vld [vmem:[%s2] sm:$0x3f]
    %v109 = vlaneseq
    %v110 = vshrl.u32 %v109, 7
    %v111 = vsub.s32 0, %v110
    %v112 = vrot.slane %v107, %v111
    %v113 = vlaneseq
    %v114 = vshrl.u32 %v113, 7
    %v115 = vsub.s32 1, %v114
    %v116 = vrot.slane %v107, %v115
    %v117 = vlaneseq
    %v118 = vshrl.u32 %v117, 7
    %v119 = vsub.s32 2, %v118
    %v120 = vrot.slane %v107, %v119
    %v121 = vlaneseq
    %v122 = vshrl.u32 %v121, 7
    %v123 = vsub.s32 3, %v122
    %v124 = vrot.slane %v107, %v123
    %v125 = vlaneseq
    %v126 = vshrl.u32 %v125, 7
    %v127 = vsub.s32 4, %v126
    %v128 = vrot.slane %v107, %v127
    %v129 = vlaneseq
    %v130 = vshrl.u32 %v129, 7
    %v131 = vsub.s32 5, %v130
    %v132 = vrot.slane %v107, %v131
    %139 = vxpose.xlu0.c.b16.start [1/8] %v51, 128
    %140 = vxpose.xlu0.c.b16.cont [2/8] %v52, 128
    %141 = vxpose.xlu0.c.b16.cont [3/8] %v53, 128
    %142 = vxpose.xlu0.c.b16.cont [4/8] %v54, 128
    %143 = vxpose.xlu0.c.b16.cont [5/8] %v55, 128
    %144 = vxpose.xlu0.c.b16.cont [6/8] %v56, 128
    %145 = vxpose.xlu0.c.b16.cont [7/8] %v57, 128
    %146 = vxpose.xlu0.c.b16.end [8/8] %v58, 128
    %v147 = vpop.trf.xlu0
    %v148 = vpop.trf.xlu0
    %v149 = vpop.trf.xlu0
    %v150 = vpop.trf.xlu0
    %v151 = vpop.trf.xlu0
    %v152 = vpop.trf.xlu0
    %v153 = vpop.trf.xlu0
    %v154 = vpop.trf.xlu0
    %v203 = vunpack.c.l.b16 %v59
    %v204 = vunpack.c.h.b16 %v59
    %v205 = vunpack.c.l.b16 %v60
    %v206 = vunpack.c.h.b16 %v60
    %v207 = vunpack.c.l.b16 %v61
    %v208 = vunpack.c.h.b16 %v61
    %v209 = vunpack.c.l.b16 %v62
    %v210 = vunpack.c.h.b16 %v62
    %v211 = vunpack.c.l.b16 %v63
    %v212 = vunpack.c.h.b16 %v63
    %v213 = vunpack.c.l.b16 %v64
    %v214 = vunpack.c.h.b16 %v64
    %v215 = vunpack.c.l.b16 %v65
    %v216 = vunpack.c.h.b16 %v65
    %v217 = vunpack.c.l.b16 %v66
    %v218 = vunpack.c.h.b16 %v66
    %v219 = vunpack.c.l.b16 %v67
    %v220 = vunpack.c.h.b16 %v67
    %v221 = vunpack.c.l.b16 %v68
    %v222 = vunpack.c.h.b16 %v68
    %v223 = vunpack.c.l.b16 %v69
    %v224 = vunpack.c.h.b16 %v69
    %v225 = vunpack.c.l.b16 %v70
    %v226 = vunpack.c.h.b16 %v70
    %v227 = vunpack.c.l.b16 %v71
    %v228 = vunpack.c.h.b16 %v71
    %v229 = vunpack.c.l.b16 %v72
    %v230 = vunpack.c.h.b16 %v72
    %v231 = vunpack.c.l.b16 %v73
    %v232 = vunpack.c.h.b16 %v73
    %v233 = vunpack.c.l.b16 %v74
    %v234 = vunpack.c.h.b16 %v74
    %v235 = vunpack.c.l.b16 %v75
    %v236 = vunpack.c.h.b16 %v75
    %v237 = vunpack.c.l.b16 %v76
    %v238 = vunpack.c.h.b16 %v76
    %v239 = vunpack.c.l.b16 %v77
    %v240 = vunpack.c.h.b16 %v77
    %v241 = vunpack.c.l.b16 %v78
    %v242 = vunpack.c.h.b16 %v78
    %v243 = vunpack.c.l.b16 %v79
    %v244 = vunpack.c.h.b16 %v79
    %v245 = vunpack.c.l.b16 %v80
    %v246 = vunpack.c.h.b16 %v80
    %v247 = vunpack.c.l.b16 %v81
    %v248 = vunpack.c.h.b16 %v81
    %v249 = vunpack.c.l.b16 %v82
    %v250 = vunpack.c.h.b16 %v82
    %v251 = vunpack.c.l.b16 %v83
    %v252 = vunpack.c.h.b16 %v83
    %v253 = vunpack.c.l.b16 %v84
    %v254 = vunpack.c.h.b16 %v84
    %v255 = vunpack.c.l.b16 %v85
    %v256 = vunpack.c.h.b16 %v85
    %v257 = vunpack.c.l.b16 %v86
    %v258 = vunpack.c.h.b16 %v86
    %v259 = vunpack.c.l.b16 %v87
    %v260 = vunpack.c.h.b16 %v87
    %v261 = vunpack.c.l.b16 %v88
    %v262 = vunpack.c.h.b16 %v88
    %v263 = vunpack.c.l.b16 %v89
    %v264 = vunpack.c.h.b16 %v89
    %v265 = vunpack.c.l.b16 %v90
    %v266 = vunpack.c.h.b16 %v90
    %v267 = vunpack.c.l.b16 %v91
    %v268 = vunpack.c.h.b16 %v91
    %v269 = vunpack.c.l.b16 %v92
    %v270 = vunpack.c.h.b16 %v92
    %v271 = vunpack.c.l.b16 %v93
    %v272 = vunpack.c.h.b16 %v93
    %v273 = vunpack.c.l.b16 %v94
    %v274 = vunpack.c.h.b16 %v94
    %v275 = vunpack.c.l.b16 %v95
    %v276 = vunpack.c.h.b16 %v95
    %v277 = vunpack.c.l.b16 %v96
    %v278 = vunpack.c.h.b16 %v96
    %v279 = vunpack.c.l.b16 %v97
    %v280 = vunpack.c.h.b16 %v97
    %v281 = vunpack.c.l.b16 %v98
    %v282 = vunpack.c.h.b16 %v98
    %v283 = vunpack.c.l.b16 %v99
    %v284 = vunpack.c.h.b16 %v99
    %v285 = vunpack.c.l.b16 %v100
    %v286 = vunpack.c.h.b16 %v100
    %v287 = vunpack.c.l.b16 %v101
    %v288 = vunpack.c.h.b16 %v101
    %v289 = vunpack.c.l.b16 %v102
    %v290 = vunpack.c.h.b16 %v102
    %v291 = vunpack.c.l.b16 %v103
    %v292 = vunpack.c.h.b16 %v103
    %v293 = vunpack.c.l.b16 %v104
    %v294 = vunpack.c.h.b16 %v104
    %v295 = vunpack.c.l.b16 %v105
    %v296 = vunpack.c.h.b16 %v105
    %v297 = vunpack.c.l.b16 %v106
    %v298 = vunpack.c.h.b16 %v106
    %v299 = vpack.c.b16 %v209, %v203
    %v300 = vpack.c.b16 %v210, %v204
    %v301 = vpack.c.b16 %v211, %v205
    %v302 = vpack.c.b16 %v212, %v206
    %v303 = vpack.c.b16 %v213, %v207
    %v304 = vpack.c.b16 %v214, %v208
    %v305 = vpack.c.b16 %v221, %v215
    %v306 = vpack.c.b16 %v222, %v216
    %v307 = vpack.c.b16 %v223, %v217
    %v308 = vpack.c.b16 %v224, %v218
    %v309 = vpack.c.b16 %v225, %v219
    %v310 = vpack.c.b16 %v226, %v220
    %v311 = vpack.c.b16 %v233, %v227
    %v312 = vpack.c.b16 %v234, %v228
    %v313 = vpack.c.b16 %v235, %v229
    %v314 = vpack.c.b16 %v236, %v230
    %v315 = vpack.c.b16 %v237, %v231
    %v316 = vpack.c.b16 %v238, %v232
    %v317 = vpack.c.b16 %v245, %v239
    %v318 = vpack.c.b16 %v246, %v240
    %v319 = vpack.c.b16 %v247, %v241
    %v320 = vpack.c.b16 %v248, %v242
    %v321 = vpack.c.b16 %v249, %v243
    %v322 = vpack.c.b16 %v250, %v244
    %v323 = vpack.c.b16 %v257, %v251
    %v324 = vpack.c.b16 %v258, %v252
    %v325 = vpack.c.b16 %v259, %v253
    %v326 = vpack.c.b16 %v260, %v254
    %v327 = vpack.c.b16 %v261, %v255
    %v328 = vpack.c.b16 %v262, %v256
    %v329 = vpack.c.b16 %v269, %v263
    %v330 = vpack.c.b16 %v270, %v264
    %v331 = vpack.c.b16 %v271, %v265
    %v332 = vpack.c.b16 %v272, %v266
    %v333 = vpack.c.b16 %v273, %v267
    %v334 = vpack.c.b16 %v274, %v268
    %v335 = vpack.c.b16 %v281, %v275
    %v336 = vpack.c.b16 %v282, %v276
    %v337 = vpack.c.b16 %v283, %v277
    %v338 = vpack.c.b16 %v284, %v278
    %v339 = vpack.c.b16 %v285, %v279
    %v340 = vpack.c.b16 %v286, %v280
    %v341 = vpack.c.b16 %v293, %v287
    %v342 = vpack.c.b16 %v294, %v288
    %v343 = vpack.c.b16 %v295, %v289
    %v344 = vpack.c.b16 %v296, %v290
    %v345 = vpack.c.b16 %v297, %v291
    %v346 = vpack.c.b16 %v298, %v292
    %395 = vmatprep.subr.bf16.mxu0 %v300
    %396 = vmatpush1.bf16.msra.mxu0 %v299
    %397 = vmatprep.subr.bf16.mxu0 %v306
    %398 = vmatpush1.bf16.msra.mxu0 %v305
    %399 = vmatprep.subr.bf16.mxu0 %v312
    %400 = vmatpush1.bf16.msra.mxu0 %v311
    %401 = vmatprep.subr.bf16.mxu0 %v318
    %402 = vmatpush1.bf16.msra.mxu0 %v317
    %403 = vmatprep.subr.bf16.mxu0 %v324
    %404 = vmatpush1.bf16.msra.mxu0 %v323
    %405 = vmatprep.subr.bf16.mxu0 %v330
    %406 = vmatpush1.bf16.msra.mxu0 %v329
    %407 = vmatprep.subr.bf16.mxu0 %v336
    %408 = vmatpush1.bf16.msra.mxu0 %v335
    %409 = vmatprep.subr.bf16.mxu0 %v342
    %410 = vmatpush1.bf16.msra.mxu0 %v341
    %411 = vmatprep.subr.bf16.mxu0 0
    %412 = vmatpush1.bf16.msra.mxu0 0
    %413 = vmatprep.subr.bf16.mxu0 0
    %414 = vmatpush1.bf16.msra.mxu0 0
    %415 = vmatprep.subr.bf16.mxu0 0
    %416 = vmatpush1.bf16.msra.mxu0 0
    %417 = vmatprep.subr.bf16.mxu0 0
    %418 = vmatpush1.bf16.msra.mxu0 0
    %419 = vmatprep.subr.bf16.mxu0 0
    %420 = vmatpush1.bf16.msra.mxu0 0
    %421 = vmatprep.subr.bf16.mxu0 0
    %422 = vmatpush1.bf16.msra.mxu0 0
    %423 = vmatprep.subr.bf16.mxu0 0
    %424 = vmatpush1.bf16.msra.mxu0 0
    %425 = vmatprep.subr.bf16.mxu0 0
    %426 = vmatpush1.bf16.msra.mxu0 0
    %427 = vmatprep.mubr.bf16.mxu0 0
    %428 = vmatmul.mubr.bf16.gmra.mrb[0].mxu0 %v147
    %v429 = vpop.f32.mrb[0].mxu0
    %v430 = vadd.f32 %v112, %v429
    %v431 = vpop.f32.mrb[0].mxu0
    %v432 = vadd.f32 %v116, %v431
    %v433 = vpop.f32.mrb[0].mxu0
    %v434 = vadd.f32 %v112, %v433
    %v435 = vpop.f32.mrb[0].mxu0
    %v436 = vadd.f32 %v116, %v435
    %437 = vdwg.mxu0
    %438 = vmatprep.subr.bf16.mxu0 %v302
    %439 = vmatpush1.bf16.msra.mxu0 %v301
    %440 = vmatprep.subr.bf16.mxu0 %v308
    %441 = vmatpush1.bf16.msra.mxu0 %v307
    %442 = vmatprep.subr.bf16.mxu0 %v314
    %443 = vmatpush1.bf16.msra.mxu0 %v313
    %444 = vmatprep.subr.bf16.mxu0 %v320
    %445 = vmatpush1.bf16.msra.mxu0 %v319
    %446 = vmatprep.subr.bf16.mxu0 %v326
    %447 = vmatpush1.bf16.msra.mxu0 %v325
    %448 = vmatprep.subr.bf16.mxu0 %v332
    %449 = vmatpush1.bf16.msra.mxu0 %v331
    %450 = vmatprep.subr.bf16.mxu0 %v338
    %451 = vmatpush1.bf16.msra.mxu0 %v337
    %452 = vmatprep.subr.bf16.mxu0 %v344
    %453 = vmatpush1.bf16.msra.mxu0 %v343
    %454 = vmatprep.subr.bf16.mxu0 0
    %455 = vmatpush1.bf16.msra.mxu0 0
    %456 = vmatprep.subr.bf16.mxu0 0
    %457 = vmatpush1.bf16.msra.mxu0 0
    %458 = vmatprep.subr.bf16.mxu0 0
    %459 = vmatpush1.bf16.msra.mxu0 0
    %460 = vmatprep.subr.bf16.mxu0 0
    %461 = vmatpush1.bf16.msra.mxu0 0
    %462 = vmatprep.subr.bf16.mxu0 0
    %463 = vmatpush1.bf16.msra.mxu0 0
    %464 = vmatprep.subr.bf16.mxu0 0
    %465 = vmatpush1.bf16.msra.mxu0 0
    %466 = vmatprep.subr.bf16.mxu0 0
    %467 = vmatpush1.bf16.msra.mxu0 0
    %468 = vmatprep.subr.bf16.mxu0 0
    %469 = vmatpush1.bf16.msra.mxu0 0
    %470 = vmatprep.mubr.bf16.mxu0 0
    %471 = vmatmul.mubr.bf16.gmra.mrb[0].mxu0 %v147
    %v472 = vpop.f32.mrb[0].mxu0
    %v473 = vadd.f32 %v120, %v472
    %v474 = vpop.f32.mrb[0].mxu0
    %v475 = vadd.f32 %v124, %v474
    %v476 = vpop.f32.mrb[0].mxu0
    %v477 = vadd.f32 %v120, %v476
    %v478 = vpop.f32.mrb[0].mxu0
    %v479 = vadd.f32 %v124, %v478
    %480 = vdwg.mxu0
    %481 = vmatprep.subr.bf16.mxu0 %v304
    %482 = vmatpush1.bf16.msra.mxu0 %v303
    %483 = vmatprep.subr.bf16.mxu0 %v310
    %484 = vmatpush1.bf16.msra.mxu0 %v309
    %485 = vmatprep.subr.bf16.mxu0 %v316
    %486 = vmatpush1.bf16.msra.mxu0 %v315
    %487 = vmatprep.subr.bf16.mxu0 %v322
    %488 = vmatpush1.bf16.msra.mxu0 %v321
    %489 = vmatprep.subr.bf16.mxu0 %v328
    %490 = vmatpush1.bf16.msra.mxu0 %v327
    %491 = vmatprep.subr.bf16.mxu0 %v334
    %492 = vmatpush1.bf16.msra.mxu0 %v333
    %493 = vmatprep.subr.bf16.mxu0 %v340
    %494 = vmatpush1.bf16.msra.mxu0 %v339
    %495 = vmatprep.subr.bf16.mxu0 %v346
    %496 = vmatpush1.bf16.msra.mxu0 %v345
    %497 = vmatprep.subr.bf16.mxu0 0
    %498 = vmatpush1.bf16.msra.mxu0 0
    %499 = vmatprep.subr.bf16.mxu0 0
    %500 = vmatpush1.bf16.msra.mxu0 0
    %501 = vmatprep.subr.bf16.mxu0 0
    %502 = vmatpush1.bf16.msra.mxu0 0
    %503 = vmatprep.subr.bf16.mxu0 0
    %504 = vmatpush1.bf16.msra.mxu0 0
    %505 = vmatprep.subr.bf16.mxu0 0
    %506 = vmatpush1.bf16.msra.mxu0 0
    %507 = vmatprep.subr.bf16.mxu0 0
    %508 = vmatpush1.bf16.msra.mxu0 0
    %509 = vmatprep.subr.bf16.mxu0 0
    %510 = vmatpush1.bf16.msra.mxu0 0
    %511 = vmatprep.subr.bf16.mxu0 0
    %512 = vmatpush1.bf16.msra.mxu0 0
    %513 = vmatprep.mubr.bf16.mxu0 0
    %514 = vmatmul.mubr.bf16.gmra.mrb[0].mxu0 %v147
    %v515 = vpop.f32.mrb[0].mxu0
    %v516 = vadd.f32 %v128, %v515
    %v517 = vpop.f32.mrb[0].mxu0
    %v518 = vadd.f32 %v132, %v517
    %v519 = vpop.f32.mrb[0].mxu0
    %v520 = vadd.f32 %v128, %v519
    %v521 = vpop.f32.mrb[0].mxu0
    %v522 = vadd.f32 %v132, %v521
    %523 = vdwg.mxu0
    %524 = vst [vmem:[#allocation2] sm:$0xff] %v430
    %525 = vst [vmem:[#allocation2 + $0x8] sm:$0xff] %v432
    %526 = vst [vmem:[#allocation2 + $0x10] sm:$0xff] %v473
    %527 = vst [vmem:[#allocation2 + $0x18] sm:$0xff] %v475
    %528 = vst [vmem:[#allocation2 + $0x20] sm:$0xff] %v516
    %529 = vst [vmem:[#allocation2 + $0x28] sm:$0xff] %v518
    %530 = vst [vmem:[#allocation2 + $0x30] sm:$0xff] %v434
    %531 = vst [vmem:[#allocation2 + $0x38] sm:$0xff] %v436
    %532 = vst [vmem:[#allocation2 + $0x40] sm:$0xff] %v477
    %533 = vst [vmem:[#allocation2 + $0x48] sm:$0xff] %v479
    %534 = vst [vmem:[#allocation2 + $0x50] sm:$0xff] %v520
    %535 = vst [vmem:[#allocation2 + $0x58] sm:$0xff] %v522
    %s536 = scalar_lea.vmem %s0, 128
    %v537 = vld [vmem:[%s536] sm:$0xff]
    %v538 = vld [vmem:[%s536 + $0x8] sm:$0xff]
    %v539 = vld [vmem:[%s536 + $0x10] sm:$0xff]
    %v540 = vld [vmem:[%s536 + $0x18] sm:$0xff]
    %v541 = vld [vmem:[%s536 + $0x20] sm:$0xff]
    %v542 = vld [vmem:[%s536 + $0x28] sm:$0xff]
    %v543 = vld [vmem:[%s536 + $0x30] sm:$0xff]
    %v544 = vld [vmem:[%s536 + $0x38] sm:$0xff]
    %v545 = vld [vmem:[%s536 + $0x40] sm:$0xff]
    %v546 = vld [vmem:[%s536 + $0x48] sm:$0xff]
    %v547 = vld [vmem:[%s536 + $0x50] sm:$0xff]
    %v548 = vld [vmem:[%s536 + $0x58] sm:$0xff]
    %v549 = vld [vmem:[%s536 + $0x60] sm:$0xff]
    %v550 = vld [vmem:[%s536 + $0x68] sm:$0xff]
    %v551 = vld [vmem:[%s536 + $0x70] sm:$0xff]
    %v552 = vld [vmem:[%s536 + $0x78] sm:$0xff]
    %v553 = vpack.c.bf16 %v538, %v537
    %v554 = vpack.c.bf16 %v540, %v539
    %v555 = vpack.c.bf16 %v542, %v541
    %v556 = vpack.c.bf16 %v544, %v543
    %v557 = vpack.c.bf16 %v546, %v545
    %v558 = vpack.c.bf16 %v548, %v547
    %v559 = vpack.c.bf16 %v550, %v549
    %v560 = vpack.c.bf16 %v552, %v551
    %v561 = vld [vmem:[#allocation4] sm:$0xff]
    %v562 = vld [vmem:[#allocation4 + $0x8] sm:$0xff]
    %v563 = vld [vmem:[#allocation4 + $0x10] sm:$0xff]
    %v564 = vld [vmem:[#allocation4 + $0x18] sm:$0xff]
    %v565 = vld [vmem:[#allocation4 + $0x20] sm:$0xff]
    %v566 = vld [vmem:[#allocation4 + $0x28] sm:$0xff]
    %v567 = vld [vmem:[#allocation4 + $0x30] sm:$0xff]
    %v568 = vld [vmem:[#allocation4 + $0x38] sm:$0xff]
    %v569 = vld [vmem:[#allocation4 + $0x40] sm:$0xff]
    %v570 = vld [vmem:[#allocation4 + $0x48] sm:$0xff]
    %v571 = vld [vmem:[#allocation4 + $0x50] sm:$0xff]
    %v572 = vld [vmem:[#allocation4 + $0x58] sm:$0xff]
    %v573 = vld [vmem:[#allocation4 + $0x60] sm:$0xff]
    %v574 = vld [vmem:[#allocation4 + $0x68] sm:$0xff]
    %v575 = vld [vmem:[#allocation4 + $0x70] sm:$0xff]
    %v576 = vld [vmem:[#allocation4 + $0x78] sm:$0xff]
    %v577 = vld [vmem:[#allocation4 + $0x80] sm:$0xff]
    %v578 = vld [vmem:[#allocation4 + $0x88] sm:$0xff]
    %v579 = vld [vmem:[#allocation4 + $0x90] sm:$0xff]
    %v580 = vld [vmem:[#allocation4 + $0x98] sm:$0xff]
    %v581 = vld [vmem:[#allocation4 + $0xa0] sm:$0xff]
    %v582 = vld [vmem:[#allocation4 + $0xa8] sm:$0xff]
    %v583 = vld [vmem:[#allocation4 + $0xb0] sm:$0xff]
    %v584 = vld [vmem:[#allocation4 + $0xb8] sm:$0xff]
    %v585 = vld [vmem:[#allocation4 + $0xc0] sm:$0xff]
    %v586 = vld [vmem:[#allocation4 + $0xc8] sm:$0xff]
    %v587 = vld [vmem:[#allocation4 + $0xd0] sm:$0xff]
    %v588 = vld [vmem:[#allocation4 + $0xd8] sm:$0xff]
    %v589 = vld [vmem:[#allocation4 + $0xe0] sm:$0xff]
    %v590 = vld [vmem:[#allocation4 + $0xe8] sm:$0xff]
    %v591 = vld [vmem:[#allocation4 + $0xf0] sm:$0xff]
    %v592 = vld [vmem:[#allocation4 + $0xf8] sm:$0xff]
    %v593 = vld [vmem:[#allocation4 + $0x100] sm:$0xff]
    %v594 = vld [vmem:[#allocation4 + $0x108] sm:$0xff]
    %v595 = vld [vmem:[#allocation4 + $0x110] sm:$0xff]
    %v596 = vld [vmem:[#allocation4 + $0x118] sm:$0xff]
    %v597 = vld [vmem:[#allocation4 + $0x120] sm:$0xff]
    %v598 = vld [vmem:[#allocation4 + $0x128] sm:$0xff]
    %v599 = vld [vmem:[#allocation4 + $0x130] sm:$0xff]
    %v600 = vld [vmem:[#allocation4 + $0x138] sm:$0xff]
    %v601 = vld [vmem:[#allocation4 + $0x140] sm:$0xff]
    %v602 = vld [vmem:[#allocation4 + $0x148] sm:$0xff]
    %v603 = vld [vmem:[#allocation4 + $0x150] sm:$0xff]
    %v604 = vld [vmem:[#allocation4 + $0x158] sm:$0xff]
    %v605 = vld [vmem:[#allocation4 + $0x160] sm:$0xff]
    %v606 = vld [vmem:[#allocation4 + $0x168] sm:$0xff]
    %v607 = vld [vmem:[#allocation4 + $0x170] sm:$0xff]
    %v608 = vld [vmem:[#allocation4 + $0x178] sm:$0xff]
    %v609 = vld [vmem:[%s2] sm:$0x3f]
    %v611 = vlaneseq
    %v612 = vshrl.u32 %v611, 7
    %v613 = vsub.s32 0, %v612
    %v614 = vrot.slane %v609, %v613
    %v615 = vlaneseq
    %v616 = vshrl.u32 %v615, 7
    %v617 = vsub.s32 1, %v616
    %v618 = vrot.slane %v609, %v617
    %v619 = vlaneseq
    %v620 = vshrl.u32 %v619, 7
    %v621 = vsub.s32 2, %v620
    %v622 = vrot.slane %v609, %v621
    %v623 = vlaneseq
    %v624 = vshrl.u32 %v623, 7
    %v625 = vsub.s32 3, %v624
    %v626 = vrot.slane %v609, %v625
    %v627 = vlaneseq
    %v628 = vshrl.u32 %v627, 7
    %v629 = vsub.s32 4, %v628
    %v630 = vrot.slane %v609, %v629
    %v631 = vlaneseq
    %v632 = vshrl.u32 %v631, 7
    %v633 = vsub.s32 5, %v632
    %v634 = vrot.slane %v609, %v633
    %641 = vxpose.xlu0.c.b16.start [1/8] %v553, 128
    %642 = vxpose.xlu0.c.b16.cont [2/8] %v554, 128
    %643 = vxpose.xlu0.c.b16.cont [3/8] %v555, 128
    %644 = vxpose.xlu0.c.b16.cont [4/8] %v556, 128
    %645 = vxpose.xlu0.c.b16.cont [5/8] %v557, 128
    %646 = vxpose.xlu0.c.b16.cont [6/8] %v558, 128
    %647 = vxpose.xlu0.c.b16.cont [7/8] %v559, 128
    %648 = vxpose.xlu0.c.b16.end [8/8] %v560, 128
    %v649 = vpop.trf.xlu0
    %v650 = vpop.trf.xlu0
    %v651 = vpop.trf.xlu0
    %v652 = vpop.trf.xlu0
    %v653 = vpop.trf.xlu0
    %v654 = vpop.trf.xlu0
    %v655 = vpop.trf.xlu0
    %v656 = vpop.trf.xlu0
    %v705 = vunpack.c.l.b16 %v561
    %v706 = vunpack.c.h.b16 %v561
    %v707 = vunpack.c.l.b16 %v562
    %v708 = vunpack.c.h.b16 %v562
    %v709 = vunpack.c.l.b16 %v563
    %v710 = vunpack.c.h.b16 %v563
    %v711 = vunpack.c.l.b16 %v564
    %v712 = vunpack.c.h.b16 %v564
    %v713 = vunpack.c.l.b16 %v565
    %v714 = vunpack.c.h.b16 %v565
    %v715 = vunpack.c.l.b16 %v566
    %v716 = vunpack.c.h.b16 %v566
    %v717 = vunpack.c.l.b16 %v567
    %v718 = vunpack.c.h.b16 %v567
    %v719 = vunpack.c.l.b16 %v568
    %v720 = vunpack.c.h.b16 %v568
    %v721 = vunpack.c.l.b16 %v569
    %v722 = vunpack.c.h.b16 %v569
    %v723 = vunpack.c.l.b16 %v570
    %v724 = vunpack.c.h.b16 %v570
    %v725 = vunpack.c.l.b16 %v571
    %v726 = vunpack.c.h.b16 %v571
    %v727 = vunpack.c.l.b16 %v572
    %v728 = vunpack.c.h.b16 %v572
    %v729 = vunpack.c.l.b16 %v573
    %v730 = vunpack.c.h.b16 %v573
    %v731 = vunpack.c.l.b16 %v574
    %v732 = vunpack.c.h.b16 %v574
    %v733 = vunpack.c.l.b16 %v575
    %v734 = vunpack.c.h.b16 %v575
    %v735 = vunpack.c.l.b16 %v576
    %v736 = vunpack.c.h.b16 %v576
    %v737 = vunpack.c.l.b16 %v577
    %v738 = vunpack.c.h.b16 %v577
    %v739 = vunpack.c.l.b16 %v578
    %v740 = vunpack.c.h.b16 %v578
    %v741 = vunpack.c.l.b16 %v579
    %v742 = vunpack.c.h.b16 %v579
    %v743 = vunpack.c.l.b16 %v580
    %v744 = vunpack.c.h.b16 %v580
    %v745 = vunpack.c.l.b16 %v581
    %v746 = vunpack.c.h.b16 %v581
    %v747 = vunpack.c.l.b16 %v582
    %v748 = vunpack.c.h.b16 %v582
    %v749 = vunpack.c.l.b16 %v583
    %v750 = vunpack.c.h.b16 %v583
    %v751 = vunpack.c.l.b16 %v584
    %v752 = vunpack.c.h.b16 %v584
    %v753 = vunpack.c.l.b16 %v585
    %v754 = vunpack.c.h.b16 %v585
    %v755 = vunpack.c.l.b16 %v586
    %v756 = vunpack.c.h.b16 %v586
    %v757 = vunpack.c.l.b16 %v587
    %v758 = vunpack.c.h.b16 %v587
    %v759 = vunpack.c.l.b16 %v588
    %v760 = vunpack.c.h.b16 %v588
    %v761 = vunpack.c.l.b16 %v589
    %v762 = vunpack.c.h.b16 %v589
    %v763 = vunpack.c.l.b16 %v590
    %v764 = vunpack.c.h.b16 %v590
    %v765 = vunpack.c.l.b16 %v591
    %v766 = vunpack.c.h.b16 %v591
    %v767 = vunpack.c.l.b16 %v592
    %v768 = vunpack.c.h.b16 %v592
    %v769 = vunpack.c.l.b16 %v593
    %v770 = vunpack.c.h.b16 %v593
    %v771 = vunpack.c.l.b16 %v594
    %v772 = vunpack.c.h.b16 %v594
    %v773 = vunpack.c.l.b16 %v595
    %v774 = vunpack.c.h.b16 %v595
    %v775 = vunpack.c.l.b16 %v596
    %v776 = vunpack.c.h.b16 %v596
    %v777 = vunpack.c.l.b16 %v597
    %v778 = vunpack.c.h.b16 %v597
    %v779 = vunpack.c.l.b16 %v598
    %v780 = vunpack.c.h.b16 %v598
    %v781 = vunpack.c.l.b16 %v599
    %v782 = vunpack.c.h.b16 %v599
    %v783 = vunpack.c.l.b16 %v600
    %v784 = vunpack.c.h.b16 %v600
    %v785 = vunpack.c.l.b16 %v601
    %v786 = vunpack.c.h.b16 %v601
    %v787 = vunpack.c.l.b16 %v602
    %v788 = vunpack.c.h.b16 %v602
    %v789 = vunpack.c.l.b16 %v603
    %v790 = vunpack.c.h.b16 %v603
    %v791 = vunpack.c.l.b16 %v604
    %v792 = vunpack.c.h.b16 %v604
    %v793 = vunpack.c.l.b16 %v605
    %v794 = vunpack.c.h.b16 %v605
    %v795 = vunpack.c.l.b16 %v606
    %v796 = vunpack.c.h.b16 %v606
    %v797 = vunpack.c.l.b16 %v607
    %v798 = vunpack.c.h.b16 %v607
    %v799 = vunpack.c.l.b16 %v608
    %v800 = vunpack.c.h.b16 %v608
    %v801 = vpack.c.b16 %v711, %v705
    %v802 = vpack.c.b16 %v712, %v706
    %v803 = vpack.c.b16 %v713, %v707
    %v804 = vpack.c.b16 %v714, %v708
    %v805 = vpack.c.b16 %v715, %v709
    %v806 = vpack.c.b16 %v716, %v710
    %v807 = vpack.c.b16 %v723, %v717
    %v808 = vpack.c.b16 %v724, %v718
    %v809 = vpack.c.b16 %v725, %v719
    %v810 = vpack.c.b16 %v726, %v720
    %v811 = vpack.c.b16 %v727, %v721
    %v812 = vpack.c.b16 %v728, %v722
    %v813 = vpack.c.b16 %v735, %v729
    %v814 = vpack.c.b16 %v736, %v730
    %v815 = vpack.c.b16 %v737, %v731
    %v816 = vpack.c.b16 %v738, %v732
    %v817 = vpack.c.b16 %v739, %v733
    %v818 = vpack.c.b16 %v740, %v734
    %v819 = vpack.c.b16 %v747, %v741
    %v820 = vpack.c.b16 %v748, %v742
    %v821 = vpack.c.b16 %v749, %v743
    %v822 = vpack.c.b16 %v750, %v744
    %v823 = vpack.c.b16 %v751, %v745
    %v824 = vpack.c.b16 %v752, %v746
    %v825 = vpack.c.b16 %v759, %v753
    %v826 = vpack.c.b16 %v760, %v754
    %v827 = vpack.c.b16 %v761, %v755
    %v828 = vpack.c.b16 %v762, %v756
    %v829 = vpack.c.b16 %v763, %v757
    %v830 = vpack.c.b16 %v764, %v758
    %v831 = vpack.c.b16 %v771, %v765
    %v832 = vpack.c.b16 %v772, %v766
    %v833 = vpack.c.b16 %v773, %v767
    %v834 = vpack.c.b16 %v774, %v768
    %v835 = vpack.c.b16 %v775, %v769
    %v836 = vpack.c.b16 %v776, %v770
    %v837 = vpack.c.b16 %v783, %v777
    %v838 = vpack.c.b16 %v784, %v778
    %v839 = vpack.c.b16 %v785, %v779
    %v840 = vpack.c.b16 %v786, %v780
    %v841 = vpack.c.b16 %v787, %v781
    %v842 = vpack.c.b16 %v788, %v782
    %v843 = vpack.c.b16 %v795, %v789
    %v844 = vpack.c.b16 %v796, %v790
    %v845 = vpack.c.b16 %v797, %v791
    %v846 = vpack.c.b16 %v798, %v792
    %v847 = vpack.c.b16 %v799, %v793
    %v848 = vpack.c.b16 %v800, %v794
    %897 = vmatprep.subr.bf16.mxu0 %v802
    %898 = vmatpush1.bf16.msra.mxu0 %v801
    %899 = vmatprep.subr.bf16.mxu0 %v808
    %900 = vmatpush1.bf16.msra.mxu0 %v807
    %901 = vmatprep.subr.bf16.mxu0 %v814
    %902 = vmatpush1.bf16.msra.mxu0 %v813
    %903 = vmatprep.subr.bf16.mxu0 %v820
    %904 = vmatpush1.bf16.msra.mxu0 %v819
    %905 = vmatprep.subr.bf16.mxu0 %v826
    %906 = vmatpush1.bf16.msra.mxu0 %v825
    %907 = vmatprep.subr.bf16.mxu0 %v832
    %908 = vmatpush1.bf16.msra.mxu0 %v831
    %909 = vmatprep.subr.bf16.mxu0 %v838
    %910 = vmatpush1.bf16.msra.mxu0 %v837
    %911 = vmatprep.subr.bf16.mxu0 %v844
    %912 = vmatpush1.bf16.msra.mxu0 %v843
    %913 = vmatprep.subr.bf16.mxu0 0
    %914 = vmatpush1.bf16.msra.mxu0 0
    %915 = vmatprep.subr.bf16.mxu0 0
    %916 = vmatpush1.bf16.msra.mxu0 0
    %917 = vmatprep.subr.bf16.mxu0 0
    %918 = vmatpush1.bf16.msra.mxu0 0
    %919 = vmatprep.subr.bf16.mxu0 0
    %920 = vmatpush1.bf16.msra.mxu0 0
    %921 = vmatprep.subr.bf16.mxu0 0
    %922 = vmatpush1.bf16.msra.mxu0 0
    %923 = vmatprep.subr.bf16.mxu0 0
    %924 = vmatpush1.bf16.msra.mxu0 0
    %925 = vmatprep.subr.bf16.mxu0 0
    %926 = vmatpush1.bf16.msra.mxu0 0
    %927 = vmatprep.subr.bf16.mxu0 0
    %928 = vmatpush1.bf16.msra.mxu0 0
    %929 = vmatprep.mubr.bf16.mxu0 0
    %930 = vmatmul.mubr.bf16.gmra.mrb[0].mxu0 %v649
    %v931 = vpop.f32.mrb[0].mxu0
    %v932 = vadd.f32 %v614, %v931
    %v933 = vpop.f32.mrb[0].mxu0
    %v934 = vadd.f32 %v618, %v933
    %v935 = vpop.f32.mrb[0].mxu0
    %v936 = vadd.f32 %v614, %v935
    %v937 = vpop.f32.mrb[0].mxu0
    %v938 = vadd.f32 %v618, %v937
    %939 = vdwg.mxu0
    %940 = vmatprep.subr.bf16.mxu0 %v804
    %941 = vmatpush1.bf16.msra.mxu0 %v803
    %942 = vmatprep.subr.bf16.mxu0 %v810
    %943 = vmatpush1.bf16.msra.mxu0 %v809
    %944 = vmatprep.subr.bf16.mxu0 %v816
    %945 = vmatpush1.bf16.msra.mxu0 %v815
    %946 = vmatprep.subr.bf16.mxu0 %v822
    %947 = vmatpush1.bf16.msra.mxu0 %v821
    %948 = vmatprep.subr.bf16.mxu0 %v828
    %949 = vmatpush1.bf16.msra.mxu0 %v827
    %950 = vmatprep.subr.bf16.mxu0 %v834
    %951 = vmatpush1.bf16.msra.mxu0 %v833
    %952 = vmatprep.subr.bf16.mxu0 %v840
    %953 = vmatpush1.bf16.msra.mxu0 %v839
    %954 = vmatprep.subr.bf16.mxu0 %v846
    %955 = vmatpush1.bf16.msra.mxu0 %v845
    %956 = vmatprep.subr.bf16.mxu0 0
    %957 = vmatpush1.bf16.msra.mxu0 0
    %958 = vmatprep.subr.bf16.mxu0 0
    %959 = vmatpush1.bf16.msra.mxu0 0
    %960 = vmatprep.subr.bf16.mxu0 0
    %961 = vmatpush1.bf16.msra.mxu0 0
    %962 = vmatprep.subr.bf16.mxu0 0
    %963 = vmatpush1.bf16.msra.mxu0 0
    %964 = vmatprep.subr.bf16.mxu0 0
    %965 = vmatpush1.bf16.msra.mxu0 0
    %966 = vmatprep.subr.bf16.mxu0 0
    %967 = vmatpush1.bf16.msra.mxu0 0
    %968 = vmatprep.subr.bf16.mxu0 0
    %969 = vmatpush1.bf16.msra.mxu0 0
    %970 = vmatprep.subr.bf16.mxu0 0
    %971 = vmatpush1.bf16.msra.mxu0 0
    %972 = vmatprep.mubr.bf16.mxu0 0
    %973 = vmatmul.mubr.bf16.gmra.mrb[0].mxu0 %v649
    %v974 = vpop.f32.mrb[0].mxu0
    %v975 = vadd.f32 %v622, %v974
    %v976 = vpop.f32.mrb[0].mxu0
    %v977 = vadd.f32 %v626, %v976
    %v978 = vpop.f32.mrb[0].mxu0
    %v979 = vadd.f32 %v622, %v978
    %v980 = vpop.f32.mrb[0].mxu0
    %v981 = vadd.f32 %v626, %v980
    %982 = vdwg.mxu0
    %983 = vmatprep.subr.bf16.mxu0 %v806
    %984 = vmatpush1.bf16.msra.mxu0 %v805
    %985 = vmatprep.subr.bf16.mxu0 %v812
    %986 = vmatpush1.bf16.msra.mxu0 %v811
    %987 = vmatprep.subr.bf16.mxu0 %v818
    %988 = vmatpush1.bf16.msra.mxu0 %v817
    %989 = vmatprep.subr.bf16.mxu0 %v824
    %990 = vmatpush1.bf16.msra.mxu0 %v823
    %991 = vmatprep.subr.bf16.mxu0 %v830
    %992 = vmatpush1.bf16.msra.mxu0 %v829
    %993 = vmatprep.subr.bf16.mxu0 %v836
    %994 = vmatpush1.bf16.msra.mxu0 %v835
    %995 = vmatprep.subr.bf16.mxu0 %v842
    %996 = vmatpush1.bf16.msra.mxu0 %v841
    %997 = vmatprep.subr.bf16.mxu0 %v848
    %998 = vmatpush1.bf16.msra.mxu0 %v847
    %999 = vmatprep.subr.bf16.mxu0 0
    %1000 = vmatpush1.bf16.msra.mxu0 0
    %1001 = vmatprep.subr.bf16.mxu0 0
    %1002 = vmatpush1.bf16.msra.mxu0 0
    %1003 = vmatprep.subr.bf16.mxu0 0
    %1004 = vmatpush1.bf16.msra.mxu0 0
    %1005 = vmatprep.subr.bf16.mxu0 0
    %1006 = vmatpush1.bf16.msra.mxu0 0
    %1007 = vmatprep.subr.bf16.mxu0 0
    %1008 = vmatpush1.bf16.msra.mxu0 0
    %1009 = vmatprep.subr.bf16.mxu0 0
    %1010 = vmatpush1.bf16.msra.mxu0 0
    %1011 = vmatprep.subr.bf16.mxu0 0
    %1012 = vmatpush1.bf16.msra.mxu0 0
    %1013 = vmatprep.subr.bf16.mxu0 0
    %1014 = vmatpush1.bf16.msra.mxu0 0
    %1015 = vmatprep.mubr.bf16.mxu0 0
    %1016 = vmatmul.mubr.bf16.gmra.mrb[0].mxu0 %v649
    %v1017 = vpop.f32.mrb[0].mxu0
    %v1018 = vadd.f32 %v630, %v1017
    %v1019 = vpop.f32.mrb[0].mxu0
    %v1020 = vadd.f32 %v634, %v1019
    %v1021 = vpop.f32.mrb[0].mxu0
    %v1022 = vadd.f32 %v630, %v1021
    %v1023 = vpop.f32.mrb[0].mxu0
    %v1024 = vadd.f32 %v634, %v1023
    %1025 = vdwg.mxu0
    %1026 = vst [vmem:[#allocation2 + $0x60] sm:$0xff] %v932
    %1027 = vst [vmem:[#allocation2 + $0x68] sm:$0xff] %v934
    %1028 = vst [vmem:[#allocation2 + $0x70] sm:$0xff] %v975
    %1029 = vst [vmem:[#allocation2 + $0x78] sm:$0xff] %v977
    %1030 = vst [vmem:[#allocation2 + $0x80] sm:$0xff] %v1018
    %1031 = vst [vmem:[#allocation2 + $0x88] sm:$0xff] %v1020
    %1032 = vst [vmem:[#allocation2 + $0x90] sm:$0xff] %v936
    %1033 = vst [vmem:[#allocation2 + $0x98] sm:$0xff] %v938
    %1034 = vst [vmem:[#allocation2 + $0xa0] sm:$0xff] %v979
    %1035 = vst [vmem:[#allocation2 + $0xa8] sm:$0xff] %v981
    %1036 = vst [vmem:[#allocation2 + $0xb0] sm:$0xff] %v1022
    %1037 = vst [vmem:[#allocation2 + $0xb8] sm:$0xff] %v1024
    %v1038 = vld [vmem:[#allocation2] sm:$0xff]
    %v1039 = vld [vmem:[#allocation2 + $0x30] sm:$0xff]
    %v1040 = vpack.c.bf16 %v1039, %v1038
    %v1041 = vld [vmem:[#allocation2 + $0x10] sm:$0xff]
    %v1042 = vld [vmem:[#allocation2 + $0x40] sm:$0xff]
    %v1043 = vpack.c.bf16 %v1042, %v1041
    %v1044 = vld [vmem:[#allocation2 + $0x20] sm:$0xff]
    %v1045 = vld [vmem:[#allocation2 + $0x50] sm:$0xff]
    %v1046 = vpack.c.bf16 %v1045, %v1044
    %1047 = vmatprep.subr.bf16.mxu0 0
    %1048 = vmatpush1.bf16.xpose.msra.mxu0 %v1043
    %1049 = vmatprep.subr.bf16.mxu0 0
    %1050 = vmatpush1.bf16.xpose.msra.mxu0 0
    %1051 = vmatprep.subr.bf16.mxu0 0
    %1052 = vmatpush1.bf16.xpose.msra.mxu0 0
    %1053 = vmatprep.subr.bf16.mxu0 0
    %1054 = vmatpush1.bf16.xpose.msra.mxu0 0
    %1055 = vmatprep.subr.bf16.mxu0 0
    %1056 = vmatpush1.bf16.xpose.msra.mxu0 0
    %1057 = vmatprep.subr.bf16.mxu0 0
    %1058 = vmatpush1.bf16.xpose.msra.mxu0 0
    %1059 = vmatprep.subr.bf16.mxu0 0
    %1060 = vmatpush1.bf16.xpose.msra.mxu0 0
    %1061 = vmatprep.subr.bf16.mxu0 0
    %1062 = vmatpush1.bf16.xpose.msra.mxu0 0
    %1063 = vmatprep.subr.bf16.mxu0 0
    %1064 = vmatpush1.bf16.xpose.msra.mxu0 0
    %1065 = vmatprep.subr.bf16.mxu0 0
    %1066 = vmatpush1.bf16.xpose.msra.mxu0 0
    %1067 = vmatprep.subr.bf16.mxu0 0
    %1068 = vmatpush1.bf16.xpose.msra.mxu0 0
    %1069 = vmatprep.subr.bf16.mxu0 0
    %1070 = vmatpush1.bf16.xpose.msra.mxu0 0
    %1071 = vmatprep.subr.bf16.mxu0 0
    %1072 = vmatpush1.bf16.xpose.msra.mxu0 0
    %1073 = vmatprep.subr.bf16.mxu0 0
    %1074 = vmatpush1.bf16.xpose.msra.mxu0 0
    %1075 = vmatprep.subr.bf16.mxu0 0
    %1076 = vmatpush1.bf16.xpose.msra.mxu0 0
    %1077 = vmatprep.subr.bf16.mxu0 0
    %1078 = vmatpush1.bf16.xpose.msra.mxu0 0
    %1079 = vmatprep.mubr.bf16.mxu0 0
    %1080 = vmatmul.mubr.bf16.gmra.mrb[0].mxu0 %v1040
    %v1081 = vpop.f32.mrb[0].mxu0
    %v1082 = vadd.f32 0.0, %v1081
    %v1083 = vpop.f32.mrb[0].mxu0
    %v1084 = vpop.f32.mrb[0].mxu0
    %v1085 = vadd.f32 0.0, %v1084
    %v1086 = vpop.f32.mrb[0].mxu0
    %1087 = vdwg.mxu0
    %v1088 = vmul.f32 %v1082, 0.03125
    %v1089 = vmul.f32 %v1085, 0.03125
    %vm1090 = vcmask 130048
    %v1091 = vsel %vm1090, %v1088, -inf
    %1092 = vmax.xlane.f32.xlu0 %v1091
    %v1093 = vpop.xlane.xlu0 %1092
    %v1094 = vsel %vm1090, %v1089, -inf
    %1095 = vmax.xlane.f32.xlu0 %v1094
    %v1096 = vpop.xlane.xlu0 %1095
    %v1097 = vsub.f32 %v1088, %v1093
    %v1098 = vsub.f32 %v1089, %v1096
    %v1099 = vmul.f32 %v1097, 1.442695
    %v1100 = vpow.pop %v1099
    %v1101 = vmul.f32 %v1098, 1.442695
    %v1102 = vpow.pop %v1101
    %v1103 = vsel %vm1090, %v1100, 0.0
    %1104 = vadd.xlane.f32.xlu0 %v1103
    %v1105 = vpop.xlane.xlu0 %1104
    %v1106 = vsel %vm1090, %v1102, 0.0
    %1107 = vadd.xlane.f32.xlu0 %v1106
    %v1108 = vpop.xlane.xlu0 %1107
    %v1109 = vrcp.pop %v1105
    %v1110 = vrcp.pop %v1108
    %v1111 = vmul.f32 %v1100, %v1109
    %v1112 = vmul.f32 %v1102, %v1110
    %v1113 = vpack.c.bf16 %v1112, %v1111
    %v1115 = vsel %vm1090, %v1113, 0
    %1117 = vmatprep.subr.bf16.mxu0 0
    %1118 = vmatpush1.bf16.msra.mxu0 %v1046
    %1119 = vmatprep.subr.bf16.mxu0 0
    %1120 = vmatpush1.bf16.msra.mxu0 0
    %1121 = vmatprep.subr.bf16.mxu0 0
    %1122 = vmatpush1.bf16.msra.mxu0 0
    %1123 = vmatprep.subr.bf16.mxu0 0
    %1124 = vmatpush1.bf16.msra.mxu0 0
    %1125 = vmatprep.subr.bf16.mxu0 0
    %1126 = vmatpush1.bf16.msra.mxu0 0
    %1127 = vmatprep.subr.bf16.mxu0 0
    %1128 = vmatpush1.bf16.msra.mxu0 0
    %1129 = vmatprep.subr.bf16.mxu0 0
    %1130 = vmatpush1.bf16.msra.mxu0 0
    %1131 = vmatprep.subr.bf16.mxu0 0
    %1132 = vmatpush1.bf16.msra.mxu0 0
    %1133 = vmatprep.subr.bf16.mxu0 0
    %1134 = vmatpush1.bf16.msra.mxu0 0
    %1135 = vmatprep.subr.bf16.mxu0 0
    %1136 = vmatpush1.bf16.msra.mxu0 0
    %1137 = vmatprep.subr.bf16.mxu0 0
    %1138 = vmatpush1.bf16.msra.mxu0 0
    %1139 = vmatprep.subr.bf16.mxu0 0
    %1140 = vmatpush1.bf16.msra.mxu0 0
    %1141 = vmatprep.subr.bf16.mxu0 0
    %1142 = vmatpush1.bf16.msra.mxu0 0
    %1143 = vmatprep.subr.bf16.mxu0 0
    %1144 = vmatpush1.bf16.msra.mxu0 0
    %1145 = vmatprep.subr.bf16.mxu0 0
    %1146 = vmatpush1.bf16.msra.mxu0 0
    %1147 = vmatprep.subr.bf16.mxu0 0
    %1148 = vmatpush1.bf16.msra.mxu0 0
    %1149 = vmatprep.mubr.bf16.mxu0 0
    %1150 = vmatmul.mubr.bf16.gmra.mrb[0].mxu0 %v1115
    %v1151 = vpop.f32.mrb[0].mxu0
    %v1152 = vadd.f32 0.0, %v1151
    %v1153 = vpop.f32.mrb[0].mxu0
    %v1154 = vpop.f32.mrb[0].mxu0
    %v1155 = vadd.f32 0.0, %v1154
    %v1156 = vpop.f32.mrb[0].mxu0
    %1157 = vdwg.mxu0
    %1158 = vst [vmem:[#allocation3] sm:$0xff] %v1152
    %1159 = vst [vmem:[#allocation3 + $0x10] sm:$0xff] %v1155
    %v1160 = vld [vmem:[#allocation2 + $0x8] sm:$0xff]
    %v1161 = vld [vmem:[#allocation2 + $0x38] sm:$0xff]
    %v1162 = vpack.c.bf16 %v1161, %v1160
    %v1163 = vld [vmem:[#allocation2 + $0x18] sm:$0xff]
    %v1164 = vld [vmem:[#allocation2 + $0x48] sm:$0xff]
    %v1165 = vpack.c.bf16 %v1164, %v1163
    %v1166 = vld [vmem:[#allocation2 + $0x28] sm:$0xff]
    %v1167 = vld [vmem:[#allocation2 + $0x58] sm:$0xff]
    %v1168 = vpack.c.bf16 %v1167, %v1166
    %1169 = vmatprep.subr.bf16.mxu0 0
    %1170 = vmatpush1.bf16.xpose.msra.mxu0 %v1165
    %1171 = vmatprep.subr.bf16.mxu0 0
    %1172 = vmatpush1.bf16.xpose.msra.mxu0 0
    %1173 = vmatprep.subr.bf16.mxu0 0
    %1174 = vmatpush1.bf16.xpose.msra.mxu0 0
    %1175 = vmatprep.subr.bf16.mxu0 0
    %1176 = vmatpush1.bf16.xpose.msra.mxu0 0
    %1177 = vmatprep.subr.bf16.mxu0 0
    %1178 = vmatpush1.bf16.xpose.msra.mxu0 0
    %1179 = vmatprep.subr.bf16.mxu0 0
    %1180 = vmatpush1.bf16.xpose.msra.mxu0 0
    %1181 = vmatprep.subr.bf16.mxu0 0
    %1182 = vmatpush1.bf16.xpose.msra.mxu0 0
    %1183 = vmatprep.subr.bf16.mxu0 0
    %1184 = vmatpush1.bf16.xpose.msra.mxu0 0
    %1185 = vmatprep.subr.bf16.mxu0 0
    %1186 = vmatpush1.bf16.xpose.msra.mxu0 0
    %1187 = vmatprep.subr.bf16.mxu0 0
    %1188 = vmatpush1.bf16.xpose.msra.mxu0 0
    %1189 = vmatprep.subr.bf16.mxu0 0
    %1190 = vmatpush1.bf16.xpose.msra.mxu0 0
    %1191 = vmatprep.subr.bf16.mxu0 0
    %1192 = vmatpush1.bf16.xpose.msra.mxu0 0
    %1193 = vmatprep.subr.bf16.mxu0 0
    %1194 = vmatpush1.bf16.xpose.msra.mxu0 0
    %1195 = vmatprep.subr.bf16.mxu0 0
    %1196 = vmatpush1.bf16.xpose.msra.mxu0 0
    %1197 = vmatprep.subr.bf16.mxu0 0
    %1198 = vmatpush1.bf16.xpose.msra.mxu0 0
    %1199 = vmatprep.subr.bf16.mxu0 0
    %1200 = vmatpush1.bf16.xpose.msra.mxu0 0
    %1201 = vmatprep.mubr.bf16.mxu0 0
    %1202 = vmatmul.mubr.bf16.gmra.mrb[0].mxu0 %v1162
    %v1203 = vpop.f32.mrb[0].mxu0
    %v1204 = vadd.f32 0.0, %v1203
    %v1205 = vpop.f32.mrb[0].mxu0
    %v1206 = vpop.f32.mrb[0].mxu0
    %v1207 = vadd.f32 0.0, %v1206
    %v1208 = vpop.f32.mrb[0].mxu0
    %1209 = vdwg.mxu0
    %v1210 = vmul.f32 %v1204, 0.03125
    %v1211 = vmul.f32 %v1207, 0.03125
    %v1212 = vsel %vm1090, %v1210, -inf
    %1213 = vmax.xlane.f32.xlu0 %v1212
    %v1214 = vpop.xlane.xlu0 %1213
    %v1215 = vsel %vm1090, %v1211, -inf
    %1216 = vmax.xlane.f32.xlu0 %v1215
    %v1217 = vpop.xlane.xlu0 %1216
    %v1218 = vsub.f32 %v1210, %v1214
    %v1219 = vsub.f32 %v1211, %v1217
    %v1220 = vmul.f32 %v1218, 1.442695
    %v1221 = vpow.pop %v1220
    %v1222 = vmul.f32 %v1219, 1.442695
    %v1223 = vpow.pop %v1222
    %v1224 = vsel %vm1090, %v1221, 0.0
    %1225 = vadd.xlane.f32.xlu0 %v1224
    %v1226 = vpop.xlane.xlu0 %1225
    %v1227 = vsel %vm1090, %v1223, 0.0
    %1228 = vadd.xlane.f32.xlu0 %v1227
    %v1229 = vpop.xlane.xlu0 %1228
    %v1230 = vrcp.pop %v1226
    %v1231 = vrcp.pop %v1229
    %v1232 = vmul.f32 %v1221, %v1230
    %v1233 = vmul.f32 %v1223, %v1231
    %v1234 = vpack.c.bf16 %v1233, %v1232
    %v1236 = vsel %vm1090, %v1234, 0
    %1238 = vmatprep.subr.bf16.mxu0 0
    %1239 = vmatpush1.bf16.msra.mxu0 %v1168
    %1240 = vmatprep.subr.bf16.mxu0 0
    %1241 = vmatpush1.bf16.msra.mxu0 0
    %1242 = vmatprep.subr.bf16.mxu0 0
    %1243 = vmatpush1.bf16.msra.mxu0 0
    %1244 = vmatprep.subr.bf16.mxu0 0
    %1245 = vmatpush1.bf16.msra.mxu0 0
    %1246 = vmatprep.subr.bf16.mxu0 0
    %1247 = vmatpush1.bf16.msra.mxu0 0
    %1248 = vmatprep.subr.bf16.mxu0 0
    %1249 = vmatpush1.bf16.msra.mxu0 0
    %1250 = vmatprep.subr.bf16.mxu0 0
    %1251 = vmatpush1.bf16.msra.mxu0 0
    %1252 = vmatprep.subr.bf16.mxu0 0
    %1253 = vmatpush1.bf16.msra.mxu0 0
    %1254 = vmatprep.subr.bf16.mxu0 0
    %1255 = vmatpush1.bf16.msra.mxu0 0
    %1256 = vmatprep.subr.bf16.mxu0 0
    %1257 = vmatpush1.bf16.msra.mxu0 0
    %1258 = vmatprep.subr.bf16.mxu0 0
    %1259 = vmatpush1.bf16.msra.mxu0 0
    %1260 = vmatprep.subr.bf16.mxu0 0
    %1261 = vmatpush1.bf16.msra.mxu0 0
    %1262 = vmatprep.subr.bf16.mxu0 0
    %1263 = vmatpush1.bf16.msra.mxu0 0
    %1264 = vmatprep.subr.bf16.mxu0 0
    %1265 = vmatpush1.bf16.msra.mxu0 0
    %1266 = vmatprep.subr.bf16.mxu0 0
    %1267 = vmatpush1.bf16.msra.mxu0 0
    %1268 = vmatprep.subr.bf16.mxu0 0
    %1269 = vmatpush1.bf16.msra.mxu0 0
    %1270 = vmatprep.mubr.bf16.mxu0 0
    %1271 = vmatmul.mubr.bf16.gmra.mrb[0].mxu0 %v1236
    %v1272 = vpop.f32.mrb[0].mxu0
    %v1273 = vadd.f32 0.0, %v1272
    %v1274 = vpop.f32.mrb[0].mxu0
    %v1275 = vpop.f32.mrb[0].mxu0
    %v1276 = vadd.f32 0.0, %v1275
    %v1277 = vpop.f32.mrb[0].mxu0
    %1278 = vdwg.mxu0
    %1279 = vst [vmem:[#allocation3 + $0x8] sm:$0xff] %v1273
    %1280 = vst [vmem:[#allocation3 + $0x18] sm:$0xff] %v1276
    %v1281 = vld [vmem:[#allocation2 + $0x60] sm:$0xff]
    %v1282 = vld [vmem:[#allocation2 + $0x90] sm:$0xff]
    %v1283 = vpack.c.bf16 %v1282, %v1281
    %v1284 = vld [vmem:[#allocation2 + $0x70] sm:$0xff]
    %v1285 = vld [vmem:[#allocation2 + $0xa0] sm:$0xff]
    %v1286 = vpack.c.bf16 %v1285, %v1284
    %v1287 = vld [vmem:[#allocation2 + $0x80] sm:$0xff]
    %v1288 = vld [vmem:[#allocation2 + $0xb0] sm:$0xff]
    %v1289 = vpack.c.bf16 %v1288, %v1287
    %1290 = vmatprep.subr.bf16.mxu0 0
    %1291 = vmatpush1.bf16.xpose.msra.mxu0 %v1286
    %1292 = vmatprep.subr.bf16.mxu0 0
    %1293 = vmatpush1.bf16.xpose.msra.mxu0 0
    %1294 = vmatprep.subr.bf16.mxu0 0
    %1295 = vmatpush1.bf16.xpose.msra.mxu0 0
    %1296 = vmatprep.subr.bf16.mxu0 0
    %1297 = vmatpush1.bf16.xpose.msra.mxu0 0
    %1298 = vmatprep.subr.bf16.mxu0 0
    %1299 = vmatpush1.bf16.xpose.msra.mxu0 0
    %1300 = vmatprep.subr.bf16.mxu0 0
    %1301 = vmatpush1.bf16.xpose.msra.mxu0 0
    %1302 = vmatprep.subr.bf16.mxu0 0
    %1303 = vmatpush1.bf16.xpose.msra.mxu0 0
    %1304 = vmatprep.subr.bf16.mxu0 0
    %1305 = vmatpush1.bf16.xpose.msra.mxu0 0
    %1306 = vmatprep.subr.bf16.mxu0 0
    %1307 = vmatpush1.bf16.xpose.msra.mxu0 0
    %1308 = vmatprep.subr.bf16.mxu0 0
    %1309 = vmatpush1.bf16.xpose.msra.mxu0 0
    %1310 = vmatprep.subr.bf16.mxu0 0
    %1311 = vmatpush1.bf16.xpose.msra.mxu0 0
    %1312 = vmatprep.subr.bf16.mxu0 0
    %1313 = vmatpush1.bf16.xpose.msra.mxu0 0
    %1314 = vmatprep.subr.bf16.mxu0 0
    %1315 = vmatpush1.bf16.xpose.msra.mxu0 0
    %1316 = vmatprep.subr.bf16.mxu0 0
    %1317 = vmatpush1.bf16.xpose.msra.mxu0 0
    %1318 = vmatprep.subr.bf16.mxu0 0
    %1319 = vmatpush1.bf16.xpose.msra.mxu0 0
    %1320 = vmatprep.subr.bf16.mxu0 0
    %1321 = vmatpush1.bf16.xpose.msra.mxu0 0
    %1322 = vmatprep.mubr.bf16.mxu0 0
    %1323 = vmatmul.mubr.bf16.gmra.mrb[0].mxu0 %v1283
    %v1324 = vpop.f32.mrb[0].mxu0
    %v1325 = vadd.f32 0.0, %v1324
    %v1326 = vpop.f32.mrb[0].mxu0
    %v1327 = vpop.f32.mrb[0].mxu0
    %v1328 = vadd.f32 0.0, %v1327
    %v1329 = vpop.f32.mrb[0].mxu0
    %1330 = vdwg.mxu0
    %v1331 = vmul.f32 %v1325, 0.03125
    %v1332 = vmul.f32 %v1328, 0.03125
    %v1333 = vsel %vm1090, %v1331, -inf
    %1334 = vmax.xlane.f32.xlu0 %v1333
    %v1335 = vpop.xlane.xlu0 %1334
    %v1336 = vsel %vm1090, %v1332, -inf
    %1337 = vmax.xlane.f32.xlu0 %v1336
    %v1338 = vpop.xlane.xlu0 %1337
    %v1339 = vsub.f32 %v1331, %v1335
    %v1340 = vsub.f32 %v1332, %v1338
    %v1341 = vmul.f32 %v1339, 1.442695
    %v1342 = vpow.pop %v1341
    %v1343 = vmul.f32 %v1340, 1.442695
    %v1344 = vpow.pop %v1343
    %v1345 = vsel %vm1090, %v1342, 0.0
    %1346 = vadd.xlane.f32.xlu0 %v1345
    %v1347 = vpop.xlane.xlu0 %1346
    %v1348 = vsel %vm1090, %v1344, 0.0
    %1349 = vadd.xlane.f32.xlu0 %v1348
    %v1350 = vpop.xlane.xlu0 %1349
    %v1351 = vrcp.pop %v1347
    %v1352 = vrcp.pop %v1350
    %v1353 = vmul.f32 %v1342, %v1351
    %v1354 = vmul.f32 %v1344, %v1352
    %v1355 = vpack.c.bf16 %v1354, %v1353
    %v1357 = vsel %vm1090, %v1355, 0
    %1359 = vmatprep.subr.bf16.mxu0 0
    %1360 = vmatpush1.bf16.msra.mxu0 %v1289
    %1361 = vmatprep.subr.bf16.mxu0 0
    %1362 = vmatpush1.bf16.msra.mxu0 0
    %1363 = vmatprep.subr.bf16.mxu0 0
    %1364 = vmatpush1.bf16.msra.mxu0 0
    %1365 = vmatprep.subr.bf16.mxu0 0
    %1366 = vmatpush1.bf16.msra.mxu0 0
    %1367 = vmatprep.subr.bf16.mxu0 0
    %1368 = vmatpush1.bf16.msra.mxu0 0
    %1369 = vmatprep.subr.bf16.mxu0 0
    %1370 = vmatpush1.bf16.msra.mxu0 0
    %1371 = vmatprep.subr.bf16.mxu0 0
    %1372 = vmatpush1.bf16.msra.mxu0 0
    %1373 = vmatprep.subr.bf16.mxu0 0
    %1374 = vmatpush1.bf16.msra.mxu0 0
    %1375 = vmatprep.subr.bf16.mxu0 0
    %1376 = vmatpush1.bf16.msra.mxu0 0
    %1377 = vmatprep.subr.bf16.mxu0 0
    %1378 = vmatpush1.bf16.msra.mxu0 0
    %1379 = vmatprep.subr.bf16.mxu0 0
    %1380 = vmatpush1.bf16.msra.mxu0 0
    %1381 = vmatprep.subr.bf16.mxu0 0
    %1382 = vmatpush1.bf16.msra.mxu0 0
    %1383 = vmatprep.subr.bf16.mxu0 0
    %1384 = vmatpush1.bf16.msra.mxu0 0
    %1385 = vmatprep.subr.bf16.mxu0 0
    %1386 = vmatpush1.bf16.msra.mxu0 0
    %1387 = vmatprep.subr.bf16.mxu0 0
    %1388 = vmatpush1.bf16.msra.mxu0 0
    %1389 = vmatprep.subr.bf16.mxu0 0
    %1390 = vmatpush1.bf16.msra.mxu0 0
    %1391 = vmatprep.mubr.bf16.mxu0 0
    %1392 = vmatmul.mubr.bf16.gmra.mrb[0].mxu0 %v1357
    %v1393 = vpop.f32.mrb[0].mxu0
    %v1394 = vadd.f32 0.0, %v1393
    %v1395 = vpop.f32.mrb[0].mxu0
    %v1396 = vpop.f32.mrb[0].mxu0
    %v1397 = vadd.f32 0.0, %v1396
    %v1398 = vpop.f32.mrb[0].mxu0
    %1399 = vdwg.mxu0
    %1400 = vst [vmem:[#allocation3 + $0x20] sm:$0xff] %v1394
    %1401 = vst [vmem:[#allocation3 + $0x30] sm:$0xff] %v1397
    %v1402 = vld [vmem:[#allocation2 + $0x68] sm:$0xff]
    %v1403 = vld [vmem:[#allocation2 + $0x98] sm:$0xff]
    %v1404 = vpack.c.bf16 %v1403, %v1402
    %v1405 = vld [vmem:[#allocation2 + $0x78] sm:$0xff]
    %v1406 = vld [vmem:[#allocation2 + $0xa8] sm:$0xff]
    %v1407 = vpack.c.bf16 %v1406, %v1405
    %v1408 = vld [vmem:[#allocation2 + $0x88] sm:$0xff]
    %v1409 = vld [vmem:[#allocation2 + $0xb8] sm:$0xff]
    %v1410 = vpack.c.bf16 %v1409, %v1408
    %1411 = vmatprep.subr.bf16.mxu0 0
    %1412 = vmatpush1.bf16.xpose.msra.mxu0 %v1407
    %1413 = vmatprep.subr.bf16.mxu0 0
    %1414 = vmatpush1.bf16.xpose.msra.mxu0 0
    %1415 = vmatprep.subr.bf16.mxu0 0
    %1416 = vmatpush1.bf16.xpose.msra.mxu0 0
    %1417 = vmatprep.subr.bf16.mxu0 0
    %1418 = vmatpush1.bf16.xpose.msra.mxu0 0
    %1419 = vmatprep.subr.bf16.mxu0 0
    %1420 = vmatpush1.bf16.xpose.msra.mxu0 0
    %1421 = vmatprep.subr.bf16.mxu0 0
    %1422 = vmatpush1.bf16.xpose.msra.mxu0 0
    %1423 = vmatprep.subr.bf16.mxu0 0
    %1424 = vmatpush1.bf16.xpose.msra.mxu0 0
    %1425 = vmatprep.subr.bf16.mxu0 0
    %1426 = vmatpush1.bf16.xpose.msra.mxu0 0
    %1427 = vmatprep.subr.bf16.mxu0 0
    %1428 = vmatpush1.bf16.xpose.msra.mxu0 0
    %1429 = vmatprep.subr.bf16.mxu0 0
    %1430 = vmatpush1.bf16.xpose.msra.mxu0 0
    %1431 = vmatprep.subr.bf16.mxu0 0
    %1432 = vmatpush1.bf16.xpose.msra.mxu0 0
    %1433 = vmatprep.subr.bf16.mxu0 0
    %1434 = vmatpush1.bf16.xpose.msra.mxu0 0
    %1435 = vmatprep.subr.bf16.mxu0 0
    %1436 = vmatpush1.bf16.xpose.msra.mxu0 0
    %1437 = vmatprep.subr.bf16.mxu0 0
    %1438 = vmatpush1.bf16.xpose.msra.mxu0 0
    %1439 = vmatprep.subr.bf16.mxu0 0
    %1440 = vmatpush1.bf16.xpose.msra.mxu0 0
    %1441 = vmatprep.subr.bf16.mxu0 0
    %1442 = vmatpush1.bf16.xpose.msra.mxu0 0
    %1443 = vmatprep.mubr.bf16.mxu0 0
    %1444 = vmatmul.mubr.bf16.gmra.mrb[0].mxu0 %v1404
    %v1445 = vpop.f32.mrb[0].mxu0
    %v1446 = vadd.f32 0.0, %v1445
    %v1447 = vpop.f32.mrb[0].mxu0
    %v1448 = vpop.f32.mrb[0].mxu0
    %v1449 = vadd.f32 0.0, %v1448
    %v1450 = vpop.f32.mrb[0].mxu0
    %1451 = vdwg.mxu0
    %v1452 = vmul.f32 %v1446, 0.03125
    %v1453 = vmul.f32 %v1449, 0.03125
    %v1454 = vsel %vm1090, %v1452, -inf
    %1455 = vmax.xlane.f32.xlu0 %v1454
    %v1456 = vpop.xlane.xlu0 %1455
    %v1457 = vsel %vm1090, %v1453, -inf
    %1458 = vmax.xlane.f32.xlu0 %v1457
    %v1459 = vpop.xlane.xlu0 %1458
    %v1460 = vsub.f32 %v1452, %v1456
    %v1461 = vsub.f32 %v1453, %v1459
    %v1462 = vmul.f32 %v1460, 1.442695
    %v1463 = vpow.pop %v1462
    %v1464 = vmul.f32 %v1461, 1.442695
    %v1465 = vpow.pop %v1464
    %v1466 = vsel %vm1090, %v1463, 0.0
    %1467 = vadd.xlane.f32.xlu0 %v1466
    %v1468 = vpop.xlane.xlu0 %1467
    %v1469 = vsel %vm1090, %v1465, 0.0
    %1470 = vadd.xlane.f32.xlu0 %v1469
    %v1471 = vpop.xlane.xlu0 %1470
    %v1472 = vrcp.pop %v1468
    %v1473 = vrcp.pop %v1471
    %v1474 = vmul.f32 %v1463, %v1472
    %v1475 = vmul.f32 %v1465, %v1473
    %v1476 = vpack.c.bf16 %v1475, %v1474
    %v1478 = vsel %vm1090, %v1476, 0
    %1480 = vmatprep.subr.bf16.mxu0 0
    %1481 = vmatpush1.bf16.msra.mxu0 %v1410
    %1482 = vmatprep.subr.bf16.mxu0 0
    %1483 = vmatpush1.bf16.msra.mxu0 0
    %1484 = vmatprep.subr.bf16.mxu0 0
    %1485 = vmatpush1.bf16.msra.mxu0 0
    %1486 = vmatprep.subr.bf16.mxu0 0
    %1487 = vmatpush1.bf16.msra.mxu0 0
    %1488 = vmatprep.subr.bf16.mxu0 0
    %1489 = vmatpush1.bf16.msra.mxu0 0
    %1490 = vmatprep.subr.bf16.mxu0 0
    %1491 = vmatpush1.bf16.msra.mxu0 0
    %1492 = vmatprep.subr.bf16.mxu0 0
    %1493 = vmatpush1.bf16.msra.mxu0 0
    %1494 = vmatprep.subr.bf16.mxu0 0
    %1495 = vmatpush1.bf16.msra.mxu0 0
    %1496 = vmatprep.subr.bf16.mxu0 0
    %1497 = vmatpush1.bf16.msra.mxu0 0
    %1498 = vmatprep.subr.bf16.mxu0 0
    %1499 = vmatpush1.bf16.msra.mxu0 0
    %1500 = vmatprep.subr.bf16.mxu0 0
    %1501 = vmatpush1.bf16.msra.mxu0 0
    %1502 = vmatprep.subr.bf16.mxu0 0
    %1503 = vmatpush1.bf16.msra.mxu0 0
    %1504 = vmatprep.subr.bf16.mxu0 0
    %1505 = vmatpush1.bf16.msra.mxu0 0
    %1506 = vmatprep.subr.bf16.mxu0 0
    %1507 = vmatpush1.bf16.msra.mxu0 0
    %1508 = vmatprep.subr.bf16.mxu0 0
    %1509 = vmatpush1.bf16.msra.mxu0 0
    %1510 = vmatprep.subr.bf16.mxu0 0
    %1511 = vmatpush1.bf16.msra.mxu0 0
    %1512 = vmatprep.mubr.bf16.mxu0 0
    %1513 = vmatmul.mubr.bf16.gmra.mrb[0].mxu0 %v1478
    %v1514 = vpop.f32.mrb[0].mxu0
    %v1515 = vadd.f32 0.0, %v1514
    %v1516 = vpop.f32.mrb[0].mxu0
    %v1517 = vpop.f32.mrb[0].mxu0
    %v1518 = vadd.f32 0.0, %v1517
    %v1519 = vpop.f32.mrb[0].mxu0
    %1520 = vdwg.mxu0
    %1521 = vst [vmem:[#allocation3 + $0x28] sm:$0xff] %v1515
    %1522 = vst [vmem:[#allocation3 + $0x38] sm:$0xff] %v1518
    %v1523 = vld [vmem:[#allocation3] sm:$0xff]
    %v1524 = vld [vmem:[#allocation3 + $0x8] sm:$0xff]
    %v1525 = vld [vmem:[#allocation3 + $0x10] sm:$0xff]
    %v1526 = vld [vmem:[#allocation3 + $0x18] sm:$0xff]
    %v1527 = vld [vmem:[#allocation3 + $0x20] sm:$0xff]
    %v1528 = vld [vmem:[#allocation3 + $0x28] sm:$0xff]
    %v1529 = vld [vmem:[#allocation3 + $0x30] sm:$0xff]
    %v1530 = vld [vmem:[#allocation3 + $0x38] sm:$0xff]
    %v1531 = vpack.c.bf16 %v1525, %v1523
    %v1532 = vpack.c.bf16 %v1526, %v1524
    %v1533 = vpack.c.bf16 %v1529, %v1527
    %v1534 = vpack.c.bf16 %v1530, %v1528
    %v1535 = vld [vmem:[%s3] sm:$0xf]
    %v1536 = vld [vmem:[%s3 + $0x4] sm:$0xf]
    %v1537 = vld [vmem:[%s3 + $0x8] sm:$0xf]
    %v1538 = vld [vmem:[%s3 + $0xc] sm:$0xf]
    %v1539 = vld [vmem:[%s3 + $0x10] sm:$0xf]
    %v1540 = vld [vmem:[%s3 + $0x14] sm:$0xf]
    %v1541 = vld [vmem:[%s3 + $0x18] sm:$0xf]
    %v1542 = vld [vmem:[%s3 + $0x1c] sm:$0xf]
    %v1543 = vld [vmem:[%s3 + $0x20] sm:$0xf]
    %v1544 = vld [vmem:[%s3 + $0x24] sm:$0xf]
    %v1545 = vld [vmem:[%s3 + $0x28] sm:$0xf]
    %v1546 = vld [vmem:[%s3 + $0x2c] sm:$0xf]
    %v1547 = vld [vmem:[%s3 + $0x30] sm:$0xf]
    %v1548 = vld [vmem:[%s3 + $0x34] sm:$0xf]
    %v1549 = vld [vmem:[%s3 + $0x38] sm:$0xf]
    %v1550 = vld [vmem:[%s3 + $0x3c] sm:$0xf]
    %v1551 = vld [vmem:[%s3 + $0x40] sm:$0xf]
    %v1552 = vld [vmem:[%s3 + $0x44] sm:$0xf]
    %v1553 = vld [vmem:[%s3 + $0x48] sm:$0xf]
    %v1554 = vld [vmem:[%s3 + $0x4c] sm:$0xf]
    %v1555 = vld [vmem:[%s3 + $0x50] sm:$0xf]
    %v1556 = vld [vmem:[%s3 + $0x54] sm:$0xf]
    %v1557 = vld [vmem:[%s3 + $0x58] sm:$0xf]
    %v1558 = vld [vmem:[%s3 + $0x5c] sm:$0xf]
    %v1559 = vld [vmem:[%s3 + $0x60] sm:$0xf]
    %v1560 = vld [vmem:[%s3 + $0x64] sm:$0xf]
    %v1561 = vld [vmem:[%s3 + $0x68] sm:$0xf]
    %v1562 = vld [vmem:[%s3 + $0x6c] sm:$0xf]
    %v1563 = vld [vmem:[%s3 + $0x70] sm:$0xf]
    %v1564 = vld [vmem:[%s3 + $0x74] sm:$0xf]
    %v1565 = vld [vmem:[%s3 + $0x78] sm:$0xf]
    %v1566 = vld [vmem:[%s3 + $0x7c] sm:$0xf]
    %v1567 = vld [vmem:[%s4] sm:$0x1]
    %v1569 = vlaneseq
    %v1570 = vshrl.u32 %v1569, 7
    %v1571 = vsub.s32 0, %v1570
    %v1572 = vrot.slane %v1567, %v1571
    %v1606 = vunpack.c.l.b16 %v1535
    %v1607 = vunpack.c.l.b16 %v1536
    %v1608 = vunpack.c.l.b16 %v1537
    %v1609 = vunpack.c.l.b16 %v1538
    %v1610 = vunpack.c.l.b16 %v1539
    %v1611 = vunpack.c.l.b16 %v1540
    %v1612 = vunpack.c.l.b16 %v1541
    %v1613 = vunpack.c.l.b16 %v1542
    %v1614 = vunpack.c.l.b16 %v1543
    %v1615 = vunpack.c.l.b16 %v1544
    %v1616 = vunpack.c.l.b16 %v1545
    %v1617 = vunpack.c.l.b16 %v1546
    %v1618 = vunpack.c.l.b16 %v1547
    %v1619 = vunpack.c.l.b16 %v1548
    %v1620 = vunpack.c.l.b16 %v1549
    %v1621 = vunpack.c.l.b16 %v1550
    %v1622 = vunpack.c.l.b16 %v1551
    %v1623 = vunpack.c.l.b16 %v1552
    %v1624 = vunpack.c.l.b16 %v1553
    %v1625 = vunpack.c.l.b16 %v1554
    %v1626 = vunpack.c.l.b16 %v1555
    %v1627 = vunpack.c.l.b16 %v1556
    %v1628 = vunpack.c.l.b16 %v1557
    %v1629 = vunpack.c.l.b16 %v1558
    %v1630 = vunpack.c.l.b16 %v1559
    %v1631 = vunpack.c.l.b16 %v1560
    %v1632 = vunpack.c.l.b16 %v1561
    %v1633 = vunpack.c.l.b16 %v1562
    %v1634 = vunpack.c.l.b16 %v1563
    %v1635 = vunpack.c.l.b16 %v1564
    %v1636 = vunpack.c.l.b16 %v1565
    %v1637 = vunpack.c.l.b16 %v1566
    %v1638 = vpack.c.b16 %v1607, %v1606
    %v1639 = vpack.c.b16 %v1609, %v1608
    %v1640 = vpack.c.b16 %v1611, %v1610
    %v1641 = vpack.c.b16 %v1613, %v1612
    %v1642 = vpack.c.b16 %v1615, %v1614
    %v1643 = vpack.c.b16 %v1617, %v1616
    %v1644 = vpack.c.b16 %v1619, %v1618
    %v1645 = vpack.c.b16 %v1621, %v1620
    %v1646 = vpack.c.b16 %v1623, %v1622
    %v1647 = vpack.c.b16 %v1625, %v1624
    %v1648 = vpack.c.b16 %v1627, %v1626
    %v1649 = vpack.c.b16 %v1629, %v1628
    %v1650 = vpack.c.b16 %v1631, %v1630
    %v1651 = vpack.c.b16 %v1633, %v1632
    %v1652 = vpack.c.b16 %v1635, %v1634
    %v1653 = vpack.c.b16 %v1637, %v1636
    %1670 = vmatprep.subr.bf16.mxu0 0
    %1671 = vmatpush1.bf16.msra.mxu0 %v1638
    %1672 = vmatprep.subr.bf16.mxu0 0
    %1673 = vmatpush1.bf16.msra.mxu0 %v1639
    %1674 = vmatprep.subr.bf16.mxu0 0
    %1675 = vmatpush1.bf16.msra.mxu0 %v1640
    %1676 = vmatprep.subr.bf16.mxu0 0
    %1677 = vmatpush1.bf16.msra.mxu0 %v1641
    %1678 = vmatprep.subr.bf16.mxu0 0
    %1679 = vmatpush1.bf16.msra.mxu0 %v1642
    %1680 = vmatprep.subr.bf16.mxu0 0
    %1681 = vmatpush1.bf16.msra.mxu0 %v1643
    %1682 = vmatprep.subr.bf16.mxu0 0
    %1683 = vmatpush1.bf16.msra.mxu0 %v1644
    %1684 = vmatprep.subr.bf16.mxu0 0
    %1685 = vmatpush1.bf16.msra.mxu0 %v1645
    %1686 = vmatprep.subr.bf16.mxu0 0
    %1687 = vmatpush1.bf16.msra.mxu0 %v1646
    %1688 = vmatprep.subr.bf16.mxu0 0
    %1689 = vmatpush1.bf16.msra.mxu0 %v1647
    %1690 = vmatprep.subr.bf16.mxu0 0
    %1691 = vmatpush1.bf16.msra.mxu0 %v1648
    %1692 = vmatprep.subr.bf16.mxu0 0
    %1693 = vmatpush1.bf16.msra.mxu0 %v1649
    %1694 = vmatprep.subr.bf16.mxu0 0
    %1695 = vmatpush1.bf16.msra.mxu0 %v1650
    %1696 = vmatprep.subr.bf16.mxu0 0
    %1697 = vmatpush1.bf16.msra.mxu0 %v1651
    %1698 = vmatprep.subr.bf16.mxu0 0
    %1699 = vmatpush1.bf16.msra.mxu0 %v1652
    %1700 = vmatprep.subr.bf16.mxu0 0
    %1701 = vmatpush1.bf16.msra.mxu0 %v1653
    %1702 = vmatprep.mubr.bf16.mxu0 %v1532
    %1703 = vmatmul.mubr.bf16.gmra.mrb[0].mxu0 %v1531
    %v1704 = vpop.f32.mrb[0].mxu0
    %v1705 = vadd.f32 %v1572, %v1704
    %v1706 = vpop.f32.mrb[0].mxu0
    %v1707 = vpop.f32.mrb[0].mxu0
    %v1708 = vadd.f32 %v1572, %v1707
    %v1709 = vpop.f32.mrb[0].mxu0
    %1710 = vmatprep.mubr.bf16.mxu0 %v1534
    %1711 = vmatmul.mubr.bf16.gmra.mrb[0].mxu0 %v1533
    %v1712 = vpop.f32.mrb[0].mxu0
    %v1713 = vadd.f32 %v1572, %v1712
    %v1714 = vpop.f32.mrb[0].mxu0
    %v1715 = vpop.f32.mrb[0].mxu0
    %v1716 = vadd.f32 %v1572, %v1715
    %v1717 = vpop.f32.mrb[0].mxu0
    %1718 = vdwg.mxu0
    %1719 = vxpose.xlu0.b32.start [1/16] %v1705, 128
    %1720 = vxpose.xlu0.b32.cont [2/16] %v1708, 128
    %1721 = vxpose.xlu0.b32.cont [3/16] 0.0, 128
    %1722 = vxpose.xlu0.b32.cont [4/16] 0.0, 128
    %1723 = vxpose.xlu0.b32.cont [5/16] 0.0, 128
    %1724 = vxpose.xlu0.b32.cont [6/16] 0.0, 128
    %1725 = vxpose.xlu0.b32.cont [7/16] 0.0, 128
    %1726 = vxpose.xlu0.b32.cont [8/16] 0.0, 128
    %1727 = vxpose.xlu0.b32.cont [9/16] 0.0, 128
    %1728 = vxpose.xlu0.b32.cont [10/16] 0.0, 128
    %1729 = vxpose.xlu0.b32.cont [11/16] 0.0, 128
    %1730 = vxpose.xlu0.b32.cont [12/16] 0.0, 128
    %1731 = vxpose.xlu0.b32.cont [13/16] 0.0, 128
    %1732 = vxpose.xlu0.b32.cont [14/16] 0.0, 128
    %1733 = vxpose.xlu0.b32.cont [15/16] 0.0, 128
    %1734 = vxpose.xlu0.b32.end [16/16] 0.0, 128
    %v1735 = vpop.trf.xlu0
    %v1736 = vpop.trf.xlu0
    %v1737 = vpop.trf.xlu0
    %v1738 = vpop.trf.xlu0
    %v1739 = vpop.trf.xlu0
    %v1740 = vpop.trf.xlu0
    %v1741 = vpop.trf.xlu0
    %v1742 = vpop.trf.xlu0
    %v1743 = vpop.trf.xlu0
    %v1744 = vpop.trf.xlu0
    %v1745 = vpop.trf.xlu0
    %v1746 = vpop.trf.xlu0
    %v1747 = vpop.trf.xlu0
    %v1748 = vpop.trf.xlu0
    %v1749 = vpop.trf.xlu0
    %v1750 = vpop.trf.xlu0
    %v1751 = vld [vmem:[%s0] sm:$0xff]
    %v1752 = vld [vmem:[%s0 + $0x8] sm:$0xff]
    %v1753 = vld [vmem:[%s0 + $0x10] sm:$0xff]
    %v1754 = vld [vmem:[%s0 + $0x18] sm:$0xff]
    %v1755 = vld [vmem:[%s0 + $0x20] sm:$0xff]
    %v1756 = vld [vmem:[%s0 + $0x28] sm:$0xff]
    %v1757 = vld [vmem:[%s0 + $0x30] sm:$0xff]
    %v1758 = vld [vmem:[%s0 + $0x38] sm:$0xff]
    %v1759 = vld [vmem:[%s0 + $0x40] sm:$0xff]
    %v1760 = vld [vmem:[%s0 + $0x48] sm:$0xff]
    %v1761 = vld [vmem:[%s0 + $0x50] sm:$0xff]
    %v1762 = vld [vmem:[%s0 + $0x58] sm:$0xff]
    %v1763 = vld [vmem:[%s0 + $0x60] sm:$0xff]
    %v1764 = vld [vmem:[%s0 + $0x68] sm:$0xff]
    %v1765 = vld [vmem:[%s0 + $0x70] sm:$0xff]
    %v1766 = vld [vmem:[%s0 + $0x78] sm:$0xff]
    %v1767 = vadd.f32 %v1735, %v1751
    %v1768 = vadd.f32 %v1736, %v1752
    %v1769 = vadd.f32 %v1737, %v1753
    %v1770 = vadd.f32 %v1738, %v1754
    %v1771 = vadd.f32 %v1739, %v1755
    %v1772 = vadd.f32 %v1740, %v1756
    %v1773 = vadd.f32 %v1741, %v1757
    %v1774 = vadd.f32 %v1742, %v1758
    %v1775 = vadd.f32 %v1743, %v1759
    %v1776 = vadd.f32 %v1744, %v1760
    %v1777 = vadd.f32 %v1745, %v1761
    %v1778 = vadd.f32 %v1746, %v1762
    %v1779 = vadd.f32 %v1747, %v1763
    %v1780 = vadd.f32 %v1748, %v1764
    %v1781 = vadd.f32 %v1749, %v1765
    %v1782 = vadd.f32 %v1750, %v1766
    %s1783 = smul.u32 0, 2
    %s1784 = smul.u32 %s1783, 128
    %s1785 = scalar_lea.vmem %s5, %s1784
    %1786 = vst.msk [vmem:[%s1785] sm:$0xff] %vm1090, %v1767
    %1787 = vst.msk [vmem:[%s1785 + $0x8] sm:$0xff] %vm1090, %v1768
    %1788 = vst.msk [vmem:[%s1785 + $0x10] sm:$0xff] %vm1090, %v1769
    %1789 = vst.msk [vmem:[%s1785 + $0x18] sm:$0xff] %vm1090, %v1770
    %1790 = vst.msk [vmem:[%s1785 + $0x20] sm:$0xff] %vm1090, %v1771
    %1791 = vst.msk [vmem:[%s1785 + $0x28] sm:$0xff] %vm1090, %v1772
    %1792 = vst.msk [vmem:[%s1785 + $0x30] sm:$0xff] %vm1090, %v1773
    %1793 = vst.msk [vmem:[%s1785 + $0x38] sm:$0xff] %vm1090, %v1774
    %1794 = vst.msk [vmem:[%s1785 + $0x40] sm:$0xff] %vm1090, %v1775
    %1795 = vst.msk [vmem:[%s1785 + $0x48] sm:$0xff] %vm1090, %v1776
    %1796 = vst.msk [vmem:[%s1785 + $0x50] sm:$0xff] %vm1090, %v1777
    %1797 = vst.msk [vmem:[%s1785 + $0x58] sm:$0xff] %vm1090, %v1778
    %1798 = vst.msk [vmem:[%s1785 + $0x60] sm:$0xff] %vm1090, %v1779
    %1799 = vst.msk [vmem:[%s1785 + $0x68] sm:$0xff] %vm1090, %v1780
    %1800 = vst.msk [vmem:[%s1785 + $0x70] sm:$0xff] %vm1090, %v1781
    %1801 = vst.msk [vmem:[%s1785 + $0x78] sm:$0xff] %vm1090, %v1782
    %1802 = vxpose.xlu0.b32.start [1/16] %v1713, 128
    %1803 = vxpose.xlu0.b32.cont [2/16] %v1716, 128
    %1804 = vxpose.xlu0.b32.cont [3/16] 0.0, 128
    %1805 = vxpose.xlu0.b32.cont [4/16] 0.0, 128
    %1806 = vxpose.xlu0.b32.cont [5/16] 0.0, 128
    %1807 = vxpose.xlu0.b32.cont [6/16] 0.0, 128
    %1808 = vxpose.xlu0.b32.cont [7/16] 0.0, 128
    %1809 = vxpose.xlu0.b32.cont [8/16] 0.0, 128
    %1810 = vxpose.xlu0.b32.cont [9/16] 0.0, 128
    %1811 = vxpose.xlu0.b32.cont [10/16] 0.0, 128
    %1812 = vxpose.xlu0.b32.cont [11/16] 0.0, 128
    %1813 = vxpose.xlu0.b32.cont [12/16] 0.0, 128
    %1814 = vxpose.xlu0.b32.cont [13/16] 0.0, 128
    %1815 = vxpose.xlu0.b32.cont [14/16] 0.0, 128
    %1816 = vxpose.xlu0.b32.cont [15/16] 0.0, 128
    %1817 = vxpose.xlu0.b32.end [16/16] 0.0, 128
    %v1818 = vpop.trf.xlu0
    %v1819 = vpop.trf.xlu0
    %v1820 = vpop.trf.xlu0
    %v1821 = vpop.trf.xlu0
    %v1822 = vpop.trf.xlu0
    %v1823 = vpop.trf.xlu0
    %v1824 = vpop.trf.xlu0
    %v1825 = vpop.trf.xlu0
    %v1826 = vpop.trf.xlu0
    %v1827 = vpop.trf.xlu0
    %v1828 = vpop.trf.xlu0
    %v1829 = vpop.trf.xlu0
    %v1830 = vpop.trf.xlu0
    %v1831 = vpop.trf.xlu0
    %v1832 = vpop.trf.xlu0
    %v1833 = vpop.trf.xlu0
    %v1834 = vld [vmem:[%s536] sm:$0xff]
    %v1835 = vld [vmem:[%s536 + $0x8] sm:$0xff]
    %v1836 = vld [vmem:[%s536 + $0x10] sm:$0xff]
    %v1837 = vld [vmem:[%s536 + $0x18] sm:$0xff]
    %v1838 = vld [vmem:[%s536 + $0x20] sm:$0xff]
    %v1839 = vld [vmem:[%s536 + $0x28] sm:$0xff]
    %v1840 = vld [vmem:[%s536 + $0x30] sm:$0xff]
    %v1841 = vld [vmem:[%s536 + $0x38] sm:$0xff]
    %v1842 = vld [vmem:[%s536 + $0x40] sm:$0xff]
    %v1843 = vld [vmem:[%s536 + $0x48] sm:$0xff]
    %v1844 = vld [vmem:[%s536 + $0x50] sm:$0xff]
    %v1845 = vld [vmem:[%s536 + $0x58] sm:$0xff]
    %v1846 = vld [vmem:[%s536 + $0x60] sm:$0xff]
    %v1847 = vld [vmem:[%s536 + $0x68] sm:$0xff]
    %v1848 = vld [vmem:[%s536 + $0x70] sm:$0xff]
    %v1849 = vld [vmem:[%s536 + $0x78] sm:$0xff]
    %v1850 = vadd.f32 %v1818, %v1834
    %v1851 = vadd.f32 %v1819, %v1835
    %v1852 = vadd.f32 %v1820, %v1836
    %v1853 = vadd.f32 %v1821, %v1837
    %v1854 = vadd.f32 %v1822, %v1838
    %v1855 = vadd.f32 %v1823, %v1839
    %v1856 = vadd.f32 %v1824, %v1840
    %v1857 = vadd.f32 %v1825, %v1841
    %v1858 = vadd.f32 %v1826, %v1842
    %v1859 = vadd.f32 %v1827, %v1843
    %v1860 = vadd.f32 %v1828, %v1844
    %v1861 = vadd.f32 %v1829, %v1845
    %v1862 = vadd.f32 %v1830, %v1846
    %v1863 = vadd.f32 %v1831, %v1847
    %v1864 = vadd.f32 %v1832, %v1848
    %v1865 = vadd.f32 %v1833, %v1849
    %s1866 = sadd.s32 %s1783, 1
    %s1867 = smul.u32 %s1866, 128
    %s1868 = scalar_lea.vmem %s5, %s1867
    %1869 = vst.msk [vmem:[%s1868] sm:$0xff] %vm1090, %v1850
    %1870 = vst.msk [vmem:[%s1868 + $0x8] sm:$0xff] %vm1090, %v1851
    %1871 = vst.msk [vmem:[%s1868 + $0x10] sm:$0xff] %vm1090, %v1852
    %1872 = vst.msk [vmem:[%s1868 + $0x18] sm:$0xff] %vm1090, %v1853
    %1873 = vst.msk [vmem:[%s1868 + $0x20] sm:$0xff] %vm1090, %v1854
    %1874 = vst.msk [vmem:[%s1868 + $0x28] sm:$0xff] %vm1090, %v1855
    %1875 = vst.msk [vmem:[%s1868 + $0x30] sm:$0xff] %vm1090, %v1856
    %1876 = vst.msk [vmem:[%s1868 + $0x38] sm:$0xff] %vm1090, %v1857
    %1877 = vst.msk [vmem:[%s1868 + $0x40] sm:$0xff] %vm1090, %v1858
    %1878 = vst.msk [vmem:[%s1868 + $0x48] sm:$0xff] %vm1090, %v1859
    %1879 = vst.msk [vmem:[%s1868 + $0x50] sm:$0xff] %vm1090, %v1860
    %1880 = vst.msk [vmem:[%s1868 + $0x58] sm:$0xff] %vm1090, %v1861
    %1881 = vst.msk [vmem:[%s1868 + $0x60] sm:$0xff] %vm1090, %v1862
    %1882 = vst.msk [vmem:[%s1868 + $0x68] sm:$0xff] %vm1090, %v1863
    %1883 = vst.msk [vmem:[%s1868 + $0x70] sm:$0xff] %vm1090, %v1864
    %1884 = vst.msk [vmem:[%s1868 + $0x78] sm:$0xff] %vm1090, %v1865
    %p1885 = scmp.eq.s32.totalorder 0, 0
    // Predicated region
    $region26: #{tpu_custom_call.1} parent=1 // pred_check
      %p1886 = pneg %p1885
    $region27: #{tpu_custom_call.1} parent=1 // pred_check_branch
      %1888 = sbr.rel (%p1886) target = $region29
    $region28: #{tpu_custom_call.1} parent=1 // pred_region
      %v1889 = vld [vmem:[%s5] sm:$0xff]
      %v1890 = vld [vmem:[%s5 + $0x8] sm:$0xff]
      %v1891 = vld [vmem:[%s5 + $0x10] sm:$0xff]
      %v1892 = vld [vmem:[%s5 + $0x18] sm:$0xff]
      %v1893 = vld [vmem:[%s5 + $0x20] sm:$0xff]
      %v1894 = vld [vmem:[%s5 + $0x28] sm:$0xff]
      %v1895 = vld [vmem:[%s5 + $0x30] sm:$0xff]
      %v1896 = vld [vmem:[%s5 + $0x38] sm:$0xff]
      %v1897 = vld [vmem:[%s5 + $0x40] sm:$0xff]
      %v1898 = vld [vmem:[%s5 + $0x48] sm:$0xff]
      %v1899 = vld [vmem:[%s5 + $0x50] sm:$0xff]
      %v1900 = vld [vmem:[%s5 + $0x58] sm:$0xff]
      %v1901 = vld [vmem:[%s5 + $0x60] sm:$0xff]
      %v1902 = vld [vmem:[%s5 + $0x68] sm:$0xff]
      %v1903 = vld [vmem:[%s5 + $0x70] sm:$0xff]
      %v1904 = vld [vmem:[%s5 + $0x78] sm:$0xff]
      %v1905 = vld [vmem:[%s5 + $0x80] sm:$0xff]
      %v1906 = vld [vmem:[%s5 + $0x88] sm:$0xff]
      %v1907 = vld [vmem:[%s5 + $0x90] sm:$0xff]
      %v1908 = vld [vmem:[%s5 + $0x98] sm:$0xff]
      %v1909 = vld [vmem:[%s5 + $0xa0] sm:$0xff]
      %v1910 = vld [vmem:[%s5 + $0xa8] sm:$0xff]
      %v1911 = vld [vmem:[%s5 + $0xb0] sm:$0xff]
      %v1912 = vld [vmem:[%s5 + $0xb8] sm:$0xff]
      %v1913 = vld [vmem:[%s5 + $0xc0] sm:$0xff]
      %v1914 = vld [vmem:[%s5 + $0xc8] sm:$0xff]
      %v1915 = vld [vmem:[%s5 + $0xd0] sm:$0xff]
      %v1916 = vld [vmem:[%s5 + $0xd8] sm:$0xff]
      %v1917 = vld [vmem:[%s5 + $0xe0] sm:$0xff]
      %v1918 = vld [vmem:[%s5 + $0xe8] sm:$0xff]
      %v1919 = vld [vmem:[%s5 + $0xf0] sm:$0xff]
      %v1920 = vld [vmem:[%s5 + $0xf8] sm:$0xff]
      %v1921 = vsel %vm1090, %v1889, 0.0
      %v1922 = vsel %vm1090, %v1890, 0.0
      %v1923 = vadd.f32 %v1921, %v1922
      %v1924 = vsel %vm1090, %v1891, 0.0
      %v1925 = vadd.f32 %v1923, %v1924
      %v1926 = vsel %vm1090, %v1892, 0.0
      %v1927 = vadd.f32 %v1925, %v1926
      %v1928 = vsel %vm1090, %v1893, 0.0
      %v1929 = vadd.f32 %v1927, %v1928
      %v1930 = vsel %vm1090, %v1894, 0.0
      %v1931 = vadd.f32 %v1929, %v1930
      %v1932 = vsel %vm1090, %v1895, 0.0
      %v1933 = vadd.f32 %v1931, %v1932
      %v1934 = vsel %vm1090, %v1896, 0.0
      %v1935 = vadd.f32 %v1933, %v1934
      %v1936 = vsel %vm1090, %v1897, 0.0
      %v1937 = vadd.f32 %v1935, %v1936
      %v1938 = vsel %vm1090, %v1898, 0.0
      %v1939 = vadd.f32 %v1937, %v1938
      %v1940 = vsel %vm1090, %v1899, 0.0
      %v1941 = vadd.f32 %v1939, %v1940
      %v1942 = vsel %vm1090, %v1900, 0.0
      %v1943 = vadd.f32 %v1941, %v1942
      %v1944 = vsel %vm1090, %v1901, 0.0
      %v1945 = vadd.f32 %v1943, %v1944
      %v1946 = vsel %vm1090, %v1902, 0.0
      %v1947 = vadd.f32 %v1945, %v1946
      %v1948 = vsel %vm1090, %v1903, 0.0
      %v1949 = vadd.f32 %v1947, %v1948
      %v1950 = vsel %vm1090, %v1904, 0.0
      %v1951 = vadd.f32 %v1949, %v1950
      %v1952 = vsel %vm1090, %v1905, 0.0
      %v1953 = vadd.f32 %v1951, %v1952
      %v1954 = vsel %vm1090, %v1906, 0.0
      %v1955 = vadd.f32 %v1953, %v1954
      %v1956 = vsel %vm1090, %v1907, 0.0
      %v1957 = vadd.f32 %v1955, %v1956
      %v1958 = vsel %vm1090, %v1908, 0.0
      %v1959 = vadd.f32 %v1957, %v1958
      %v1960 = vsel %vm1090, %v1909, 0.0
      %v1961 = vadd.f32 %v1959, %v1960
      %v1962 = vsel %vm1090, %v1910, 0.0
      %v1963 = vadd.f32 %v1961, %v1962
      %v1964 = vsel %vm1090, %v1911, 0.0
      %v1965 = vadd.f32 %v1963, %v1964
      %v1966 = vsel %vm1090, %v1912, 0.0
      %v1967 = vadd.f32 %v1965, %v1966
      %v1968 = vsel %vm1090, %v1913, 0.0
      %v1969 = vadd.f32 %v1967, %v1968
      %v1970 = vsel %vm1090, %v1914, 0.0
      %v1971 = vadd.f32 %v1969, %v1970
      %v1972 = vsel %vm1090, %v1915, 0.0
      %v1973 = vadd.f32 %v1971, %v1972
      %v1974 = vsel %vm1090, %v1916, 0.0
      %v1975 = vadd.f32 %v1973, %v1974
      %v1976 = vsel %vm1090, %v1917, 0.0
      %v1977 = vadd.f32 %v1975, %v1976
      %v1978 = vsel %vm1090, %v1918, 0.0
      %v1979 = vadd.f32 %v1977, %v1978
      %v1980 = vsel %vm1090, %v1919, 0.0
      %v1981 = vadd.f32 %v1979, %v1980
      %v1982 = vsel %vm1090, %v1920, 0.0
      %v1983 = vadd.f32 %v1981, %v1982
      %1984 = vadd.xlane.f32.xlu0 %v1983
      %v1985 = vpop.xlane.xlu0 %1984
      %v1986 = vrot.slane %v1985, 4
      %v1987 = vadd.f32 %v1985, %v1986
      %v1988 = vrot.slane %v1987, 2
      %v1989 = vadd.f32 %v1987, %v1988
      %v1990 = vrot.slane %v1989, 1
      %v1991 = vadd.f32 %v1989, %v1990
      %s1992 = vtos %v1991
      %v1993 = vrcp.pop 4096.0
      %s1994 = vtos %v1993
      %s1995 = smul.f32 %s1992, %s1994
      %v1996 = vstv %s1995
      %v1997 = vsub.f32 %v1889, %v1996
      %v1998 = vsub.f32 %v1890, %v1996
      %v1999 = vsub.f32 %v1891, %v1996
      %v2000 = vsub.f32 %v1892, %v1996
      %v2001 = vsub.f32 %v1893, %v1996
      %v2002 = vsub.f32 %v1894, %v1996
      %v2003 = vsub.f32 %v1895, %v1996
      %v2004 = vsub.f32 %v1896, %v1996
      %v2005 = vsub.f32 %v1897, %v1996
      %v2006 = vsub.f32 %v1898, %v1996
      %v2007 = vsub.f32 %v1899, %v1996
      %v2008 = vsub.f32 %v1900, %v1996
      %v2009 = vsub.f32 %v1901, %v1996
      %v2010 = vsub.f32 %v1902, %v1996
      %v2011 = vsub.f32 %v1903, %v1996
      %v2012 = vsub.f32 %v1904, %v1996
      %v2013 = vsub.f32 %v1905, %v1996
      %v2014 = vsub.f32 %v1906, %v1996
      %v2015 = vsub.f32 %v1907, %v1996
      %v2016 = vsub.f32 %v1908, %v1996
      %v2017 = vsub.f32 %v1909, %v1996
      %v2018 = vsub.f32 %v1910, %v1996
      %v2019 = vsub.f32 %v1911, %v1996
      %v2020 = vsub.f32 %v1912, %v1996
      %v2021 = vsub.f32 %v1913, %v1996
      %v2022 = vsub.f32 %v1914, %v1996
      %v2023 = vsub.f32 %v1915, %v1996
      %v2024 = vsub.f32 %v1916, %v1996
      %v2025 = vsub.f32 %v1917, %v1996
      %v2026 = vsub.f32 %v1918, %v1996
      %v2027 = vsub.f32 %v1919, %v1996
      %v2028 = vsub.f32 %v1920, %v1996
      %v2029 = vmul.f32 %v1997, %v1997
      %v2030 = vmul.f32 %v1998, %v1998
      %v2031 = vmul.f32 %v1999, %v1999
      %v2032 = vmul.f32 %v2000, %v2000
      %v2033 = vmul.f32 %v2001, %v2001
      %v2034 = vmul.f32 %v2002, %v2002
      %v2035 = vmul.f32 %v2003, %v2003
      %v2036 = vmul.f32 %v2004, %v2004
      %v2037 = vmul.f32 %v2005, %v2005
      %v2038 = vmul.f32 %v2006, %v2006
      %v2039 = vmul.f32 %v2007, %v2007
      %v2040 = vmul.f32 %v2008, %v2008
      %v2041 = vmul.f32 %v2009, %v2009
      %v2042 = vmul.f32 %v2010, %v2010
      %v2043 = vmul.f32 %v2011, %v2011
      %v2044 = vmul.f32 %v2012, %v2012
      %v2045 = vmul.f32 %v2013, %v2013
      %v2046 = vmul.f32 %v2014, %v2014
      %v2047 = vmul.f32 %v2015, %v2015
      %v2048 = vmul.f32 %v2016, %v2016
      %v2049 = vmul.f32 %v2017, %v2017
      %v2050 = vmul.f32 %v2018, %v2018
      %v2051 = vmul.f32 %v2019, %v2019
      %v2052 = vmul.f32 %v2020, %v2020
      %v2053 = vmul.f32 %v2021, %v2021
      %v2054 = vmul.f32 %v2022, %v2022
      %v2055 = vmul.f32 %v2023, %v2023
      %v2056 = vmul.f32 %v2024, %v2024
      %v2057 = vmul.f32 %v2025, %v2025
      %v2058 = vmul.f32 %v2026, %v2026
      %v2059 = vmul.f32 %v2027, %v2027
      %v2060 = vmul.f32 %v2028, %v2028
      %v2061 = vsel %vm1090, %v2029, 0.0
      %v2062 = vsel %vm1090, %v2030, 0.0
      %v2063 = vadd.f32 %v2061, %v2062
      %v2064 = vsel %vm1090, %v2031, 0.0
      %v2065 = vadd.f32 %v2063, %v2064
      %v2066 = vsel %vm1090, %v2032, 0.0
      %v2067 = vadd.f32 %v2065, %v2066
      %v2068 = vsel %vm1090, %v2033, 0.0
      %v2069 = vadd.f32 %v2067, %v2068
      %v2070 = vsel %vm1090, %v2034, 0.0
      %v2071 = vadd.f32 %v2069, %v2070
      %v2072 = vsel %vm1090, %v2035, 0.0
      %v2073 = vadd.f32 %v2071, %v2072
      %v2074 = vsel %vm1090, %v2036, 0.0
      %v2075 = vadd.f32 %v2073, %v2074
      %v2076 = vsel %vm1090, %v2037, 0.0
      %v2077 = vadd.f32 %v2075, %v2076
      %v2078 = vsel %vm1090, %v2038, 0.0
      %v2079 = vadd.f32 %v2077, %v2078
      %v2080 = vsel %vm1090, %v2039, 0.0
      %v2081 = vadd.f32 %v2079, %v2080
      %v2082 = vsel %vm1090, %v2040, 0.0
      %v2083 = vadd.f32 %v2081, %v2082
      %v2084 = vsel %vm1090, %v2041, 0.0
      %v2085 = vadd.f32 %v2083, %v2084
      %v2086 = vsel %vm1090, %v2042, 0.0
      %v2087 = vadd.f32 %v2085, %v2086
      %v2088 = vsel %vm1090, %v2043, 0.0
      %v2089 = vadd.f32 %v2087, %v2088
      %v2090 = vsel %vm1090, %v2044, 0.0
      %v2091 = vadd.f32 %v2089, %v2090
      %v2092 = vsel %vm1090, %v2045, 0.0
      %v2093 = vadd.f32 %v2091, %v2092
      %v2094 = vsel %vm1090, %v2046, 0.0
      %v2095 = vadd.f32 %v2093, %v2094
      %v2096 = vsel %vm1090, %v2047, 0.0
      %v2097 = vadd.f32 %v2095, %v2096
      %v2098 = vsel %vm1090, %v2048, 0.0
      %v2099 = vadd.f32 %v2097, %v2098
      %v2100 = vsel %vm1090, %v2049, 0.0
      %v2101 = vadd.f32 %v2099, %v2100
      %v2102 = vsel %vm1090, %v2050, 0.0
      %v2103 = vadd.f32 %v2101, %v2102
      %v2104 = vsel %vm1090, %v2051, 0.0
      %v2105 = vadd.f32 %v2103, %v2104
      %v2106 = vsel %vm1090, %v2052, 0.0
      %v2107 = vadd.f32 %v2105, %v2106
      %v2108 = vsel %vm1090, %v2053, 0.0
      %v2109 = vadd.f32 %v2107, %v2108
      %v2110 = vsel %vm1090, %v2054, 0.0
      %v2111 = vadd.f32 %v2109, %v2110
      %v2112 = vsel %vm1090, %v2055, 0.0
      %v2113 = vadd.f32 %v2111, %v2112
      %v2114 = vsel %vm1090, %v2056, 0.0
      %v2115 = vadd.f32 %v2113, %v2114
      %v2116 = vsel %vm1090, %v2057, 0.0
      %v2117 = vadd.f32 %v2115, %v2116
      %v2118 = vsel %vm1090, %v2058, 0.0
      %v2119 = vadd.f32 %v2117, %v2118
      %v2120 = vsel %vm1090, %v2059, 0.0
      %v2121 = vadd.f32 %v2119, %v2120
      %v2122 = vsel %vm1090, %v2060, 0.0
      %v2123 = vadd.f32 %v2121, %v2122
      %2124 = vadd.xlane.f32.xlu0 %v2123
      %v2125 = vpop.xlane.xlu0 %2124
      %v2126 = vrot.slane %v2125, 4
      %v2127 = vadd.f32 %v2125, %v2126
      %v2128 = vrot.slane %v2127, 2
      %v2129 = vadd.f32 %v2127, %v2128
      %v2130 = vrot.slane %v2129, 1
      %v2131 = vadd.f32 %v2129, %v2130
      %s2132 = vtos %v2131
      %v2133 = vrcp.pop 4096.0
      %s2134 = vtos %v2133
      %s2135 = smul.f32 %s2132, %s2134
      %s2136 = sadd.f32 %s2135, 1e-05
      %v2137 = vstv %s2136
      %v2138 = vrsqrt.pop %v2137
      %s2139 = vtos %v2138
      %v2140 = vstv %s2139
      %v2141 = vmul.f32 %v1997, %v2140
      %v2142 = vmul.f32 %v1998, %v2140
      %v2143 = vmul.f32 %v1999, %v2140
      %v2144 = vmul.f32 %v2000, %v2140
      %v2145 = vmul.f32 %v2001, %v2140
      %v2146 = vmul.f32 %v2002, %v2140
      %v2147 = vmul.f32 %v2003, %v2140
      %v2148 = vmul.f32 %v2004, %v2140
      %v2149 = vmul.f32 %v2005, %v2140
      %v2150 = vmul.f32 %v2006, %v2140
      %v2151 = vmul.f32 %v2007, %v2140
      %v2152 = vmul.f32 %v2008, %v2140
      %v2153 = vmul.f32 %v2009, %v2140
      %v2154 = vmul.f32 %v2010, %v2140
      %v2155 = vmul.f32 %v2011, %v2140
      %v2156 = vmul.f32 %v2012, %v2140
      %v2157 = vmul.f32 %v2013, %v2140
      %v2158 = vmul.f32 %v2014, %v2140
      %v2159 = vmul.f32 %v2015, %v2140
      %v2160 = vmul.f32 %v2016, %v2140
      %v2161 = vmul.f32 %v2017, %v2140
      %v2162 = vmul.f32 %v2018, %v2140
      %v2163 = vmul.f32 %v2019, %v2140
      %v2164 = vmul.f32 %v2020, %v2140
      %v2165 = vmul.f32 %v2021, %v2140
      %v2166 = vmul.f32 %v2022, %v2140
      %v2167 = vmul.f32 %v2023, %v2140
      %v2168 = vmul.f32 %v2024, %v2140
      %v2169 = vmul.f32 %v2025, %v2140
      %v2170 = vmul.f32 %v2026, %v2140
      %v2171 = vmul.f32 %v2027, %v2140
      %v2172 = vmul.f32 %v2028, %v2140
      %2173 = vst.msk [vmem:[%s5] sm:$0xff] %vm1090, %v2141
      %2174 = vst.msk [vmem:[%s5 + $0x8] sm:$0xff] %vm1090, %v2142
      %2175 = vst.msk [vmem:[%s5 + $0x10] sm:$0xff] %vm1090, %v2143
      %2176 = vst.msk [vmem:[%s5 + $0x18] sm:$0xff] %vm1090, %v2144
      %2177 = vst.msk [vmem:[%s5 + $0x20] sm:$0xff] %vm1090, %v2145
      %2178 = vst.msk [vmem:[%s5 + $0x28] sm:$0xff] %vm1090, %v2146
      %2179 = vst.msk [vmem:[%s5 + $0x30] sm:$0xff] %vm1090, %v2147
      %2180 = vst.msk [vmem:[%s5 + $0x38] sm:$0xff] %vm1090, %v2148
      %2181 = vst.msk [vmem:[%s5 + $0x40] sm:$0xff] %vm1090, %v2149
      %2182 = vst.msk [vmem:[%s5 + $0x48] sm:$0xff] %vm1090, %v2150
      %2183 = vst.msk [vmem:[%s5 + $0x50] sm:$0xff] %vm1090, %v2151
      %2184 = vst.msk [vmem:[%s5 + $0x58] sm:$0xff] %vm1090, %v2152
      %2185 = vst.msk [vmem:[%s5 + $0x60] sm:$0xff] %vm1090, %v2153
      %2186 = vst.msk [vmem:[%s5 + $0x68] sm:$0xff] %vm1090, %v2154
      %2187 = vst.msk [vmem:[%s5 + $0x70] sm:$0xff] %vm1090, %v2155
      %2188 = vst.msk [vmem:[%s5 + $0x78] sm:$0xff] %vm1090, %v2156
      %2189 = vst.msk [vmem:[%s5 + $0x80] sm:$0xff] %vm1090, %v2157
      %2190 = vst.msk [vmem:[%s5 + $0x88] sm:$0xff] %vm1090, %v2158
      %2191 = vst.msk [vmem:[%s5 + $0x90] sm:$0xff] %vm1090, %v2159
      %2192 = vst.msk [vmem:[%s5 + $0x98] sm:$0xff] %vm1090, %v2160
      %2193 = vst.msk [vmem:[%s5 + $0xa0] sm:$0xff] %vm1090, %v2161
      %2194 = vst.msk [vmem:[%s5 + $0xa8] sm:$0xff] %vm1090, %v2162
      %2195 = vst.msk [vmem:[%s5 + $0xb0] sm:$0xff] %vm1090, %v2163
      %2196 = vst.msk [vmem:[%s5 + $0xb8] sm:$0xff] %vm1090, %v2164
      %2197 = vst.msk [vmem:[%s5 + $0xc0] sm:$0xff] %vm1090, %v2165
      %2198 = vst.msk [vmem:[%s5 + $0xc8] sm:$0xff] %vm1090, %v2166
      %2199 = vst.msk [vmem:[%s5 + $0xd0] sm:$0xff] %vm1090, %v2167
      %2200 = vst.msk [vmem:[%s5 + $0xd8] sm:$0xff] %vm1090, %v2168
      %2201 = vst.msk [vmem:[%s5 + $0xe0] sm:$0xff] %vm1090, %v2169
      %2202 = vst.msk [vmem:[%s5 + $0xe8] sm:$0xff] %vm1090, %v2170
      %2203 = vst.msk [vmem:[%s5 + $0xf0] sm:$0xff] %vm1090, %v2171
      %2204 = vst.msk [vmem:[%s5 + $0xf8] sm:$0xff] %vm1090, %v2172
    $region29: #{tpu_custom_call.1} parent=1 // pred_fallthru
      _
    // Predicated region
    $region30: #{tpu_custom_call.1} parent=1 // pred_check
      _
    $region31: #{tpu_custom_call.1} parent=1 // pred_check_branch
      %2206 = sbr.rel (0) target = $region33
    $region32: #{tpu_custom_call.1} parent=1 // pred_region
      _
    $region33: #{tpu_custom_call.1} parent=1 // pred_fallthru
      _
    // Predicated region
    $region34: #{tpu_custom_call.1} parent=1 // pred_check
      _
    $region35: #{tpu_custom_call.1} parent=1 // pred_check_branch
      %2208 = sbr.rel (0) target = $region37
    $region36: #{tpu_custom_call.1} parent=1 // pred_region
      _
    $region37: #{tpu_custom_call.1} parent=1 // pred_fallthru
      _
    %2209 = vsyncpa [#allocation5], 1

</llo_original>
